<compile_context>
chip_gen: v5e
topology: v5e:2x2
jax: 0.10.0
libtpu: 0.0.40
codegen_flags: <defaults>
</compile_context>

<pallas_src>
import functools

import jax
import jax.numpy as jnp
from jax.experimental import pallas as pl
from jax.experimental.pallas import tpu as pltpu

TM_MAX = 256  # max rows per M-tile


# ----------------------------------------------------------------------------
# Kernel A: fused matmul + bias + ReLU (used for conv1)
# ----------------------------------------------------------------------------
def _matmul_bias_act_kernel(a_ref, b_ref, bias_ref, o_ref, *, relu):
    acc = jnp.dot(a_ref[...], b_ref[...], preferred_element_type=jnp.float32)
    acc = acc + bias_ref[...]
    if relu:
        acc = jnp.maximum(acc, 0.0)
    o_ref[...] = acc.astype(o_ref.dtype)


def matmul_bias_act(A, B, bias, *, relu, out_dtype=jnp.bfloat16):
    """(M,K)@(K,N) + bias [+ReLU].  bf16 operands, f32 MXU accumulation."""
    M, K = A.shape
    K2, N = B.shape
    assert K == K2
    if A.dtype != jnp.bfloat16:
        A = A.astype(jnp.bfloat16)

    tm = M if M <= TM_MAX else TM_MAX
    grid = (pl.cdiv(M, tm),)

    return pl.pallas_call(
        functools.partial(_matmul_bias_act_kernel, relu=relu),
        out_shape=jax.ShapeDtypeStruct((M, N), out_dtype),
        grid_spec=pltpu.PrefetchScalarGridSpec(
            num_scalar_prefetch=0,
            grid=grid,
            in_specs=[
                pl.BlockSpec((tm, K), lambda i: (i, 0)),   # A tile
                pl.BlockSpec((K, N), lambda i: (0, 0)),    # weights (resident)
                pl.BlockSpec((1, N), lambda i: (0, 0)),    # folded BN bias
            ],
            out_specs=pl.BlockSpec((tm, N), lambda i: (i, 0)),
        ),
        compiler_params=pltpu.CompilerParams(
            dimension_semantics=("parallel",)),
    )(A, B, bias)


# ----------------------------------------------------------------------------
# Kernel B: conv2 (im2col matmul) + BN + ReLU + conv3 + BN
#           + shortcut (projection conv or identity) + residual + ReLU
# ----------------------------------------------------------------------------
def _bottleneck_tail_kernel(patches_ref, w2_ref, b2_ref, w3_ref, b3_ref,
                            res_ref, *rest, has_projection):
    if has_projection:
        wsc_ref, bsc_ref, o_ref = rest
    else:
        (o_ref,) = rest

    # conv2 (3x3 via im2col) + BN + ReLU — stays in registers/VMEM.
    y2 = jnp.dot(patches_ref[...], w2_ref[...],
                 preferred_element_type=jnp.float32)
    y2 = jnp.maximum(y2 + b2_ref[...], 0.0).astype(jnp.bfloat16)

    # conv3 (1x1) + BN
    acc = jnp.dot(y2, w3_ref[...], preferred_element_type=jnp.float32)
    acc = acc + b3_ref[...]

    # shortcut branch (fused): projection 1x1 conv + BN, or identity (bf16->f32)
    if has_projection:
        acc = acc + jnp.dot(res_ref[...], wsc_ref[...],
                            preferred_element_type=jnp.float32) + bsc_ref[...]
    else:
        acc = acc + res_ref[...].astype(jnp.float32)

    o_ref[...] = jnp.maximum(acc, 0.0).astype(o_ref.dtype)


def bottleneck_tail(patches, w2, b2, w3, b3, res, wsc=None, bsc=None,
                    *, out_dtype=jnp.bfloat16):
    M, K2 = patches.shape
    P = w2.shape[1]
    C4 = w3.shape[1]
    Cres = res.shape[1]
    has_projection = wsc is not None

    tm = M if M <= TM_MAX else TM_MAX
    grid = (pl.cdiv(M, tm),)

    in_specs = [
        pl.BlockSpec((tm, K2), lambda i: (i, 0)),      # im2col patches tile
        pl.BlockSpec((K2, P), lambda i: (0, 0)),       # w2 (resident)
        pl.BlockSpec((1, P), lambda i: (0, 0)),        # b2
        pl.BlockSpec((P, C4), lambda i: (0, 0)),       # w3 (resident)
        pl.BlockSpec((1, C4), lambda i: (0, 0)),       # b3
        pl.BlockSpec((tm, Cres), lambda i: (i, 0)),    # shortcut operand (bf16)
    ]
    args = [patches, w2, b2, w3, b3, res]
    if has_projection:
        in_specs += [pl.BlockSpec((Cres, C4), lambda i: (0, 0)),   # wsc
                     pl.BlockSpec((1, C4), lambda i: (0, 0))]      # bsc
        args += [wsc, bsc]

    return pl.pallas_call(
        functools.partial(_bottleneck_tail_kernel,
                          has_projection=has_projection),
        out_shape=jax.ShapeDtypeStruct((M, C4), out_dtype),
        grid_spec=pltpu.PrefetchScalarGridSpec(
            num_scalar_prefetch=0,
            grid=grid,
            in_specs=in_specs,
            out_specs=pl.BlockSpec((tm, C4), lambda i: (i, 0)),  # 128-lane dense
        ),
        compiler_params=pltpu.CompilerParams(
            dimension_semantics=("parallel",)),
    )(*args)


# ----------------------------------------------------------------------------
# Weight packing (done ONCE, outside the forward pass)
# ----------------------------------------------------------------------------
def _bn_fold(bn, eps=1e-5):
    scale = bn["gamma"] / jnp.sqrt(bn["var"] + eps)
    bias = bn["beta"] - bn["mean"] * scale
    return scale, bias


def _pack_conv_bn(w_oihw, bn):
    """OIHW conv weight + BN -> ((k*k*Cin,Cout) bf16 weight, (1,Cout) f32 bias).

    BN scale is folded into the weight columns in f32 before the bf16 cast.
    Row ordering (kh, kw, Cin) matches the im2col patch ordering below."""
    cout, cin, kh, kw = w_oihw.shape
    scale, bias = _bn_fold(bn)
    wmat = jnp.transpose(w_oihw, (2, 3, 1, 0)).reshape(kh * kw * cin, cout)
    wmat = (wmat * scale[None, :]).astype(jnp.bfloat16)
    return wmat, bias.reshape(1, cout).astype(jnp.float32)


def prepare_block_params(p):
    packed = {"stride": int(p["stride"]), "has_projection": "sc_w" in p}
    packed["w1"], packed["b1"] = _pack_conv_bn(p["conv1_w"], p["bn1"])
    packed["w2"], packed["b2"] = _pack_conv_bn(p["conv2_w"], p["bn2"])
    packed["w3"], packed["b3"] = _pack_conv_bn(p["conv3_w"], p["bn3"])
    if packed["has_projection"]:
        packed["wsc"], packed["bsc"] = _pack_conv_bn(p["sc_w"], p["sc_bn"])
    return packed


# ----------------------------------------------------------------------------
# Block forward (NHWC, bf16 activations)
# ----------------------------------------------------------------------------
def _im2col_3x3(x_nhwc, stride):
    """3x3/pad-1 im2col in XLA (bf16).  TODO(synk): fuse into kernel B."""
    n, h, w, c = x_nhwc.shape
    xp = jnp.pad(x_nhwc, ((0, 0), (1, 1), (1, 1), (0, 0)))
    ho = (h + 2 - 3) // stride + 1
    wo = (w + 2 - 3) // stride + 1
    cols = []
    for kh in range(3):
        for kw in range(3):
            cols.append(xp[:, kh:kh + stride * (ho - 1) + 1:stride,
                           kw:kw + stride * (wo - 1) + 1:stride, :])
    patches = jnp.stack(cols, axis=3)              # (n, ho, wo, 9, c)
    return patches.reshape(n * ho * wo, 9 * c), (n, ho, wo)


def bottleneck_block_nhwc(x_nhwc, pk):
    """One Bottleneck block: NHWC bf16 in -> NHWC bf16 out."""
    n, h, w, cin = x_nhwc.shape
    stride = pk["stride"]
    if x_nhwc.dtype != jnp.bfloat16:
        x_nhwc = x_nhwc.astype(jnp.bfloat16)

    # kernel A: conv1 (1x1) + BN + ReLU  (bf16 output)
    planes = pk["w1"].shape[1]
    y1 = matmul_bias_act(x_nhwc.reshape(n * h * w, cin),
                         pk["w1"], pk["b1"], relu=True)
    y1 = y1.reshape(n, h, w, planes)

    # im2col for the 3x3 conv (bf16, XLA)
    patches, (_, ho, wo) = _im2col_3x3(y1, stride)

    # kernel B: conv2 + conv3 + shortcut + residual + final ReLU
    c4 = pk["w3"].shape[1]
    if pk["has_projection"]:
        xs = x_nhwc[:, ::stride, ::stride, :] if stride != 1 else x_nhwc
        out = bottleneck_tail(patches, pk["w2"], pk["b2"], pk["w3"], pk["b3"],
                              xs.reshape(n * ho * wo, cin),
                              pk["wsc"], pk["bsc"])
    else:
        out = bottleneck_tail(patches, pk["w2"], pk["b2"], pk["w3"], pk["b3"],
                              x_nhwc.reshape(n * h * w, c4))
    return out.reshape(n, ho, wo, c4)


def bottleneck_forward(x_nchw, packed):
    """Single block with PyTorch-style NCHW in/out (layout converted once)."""
    x = jnp.transpose(x_nchw, (0, 2, 3, 1)).astype(jnp.bfloat16)
    y = bottleneck_block_nhwc(x, packed)
    return jnp.transpose(y.astype(jnp.float32), (0, 3, 1, 2))


# ----------------------------------------------------------------------------
# Pure-JAX reference (XLA conv, f32) for correctness checking
# ----------------------------------------------------------------------------
def _ref_conv(x_nchw, w, stride, padding):
    return jax.lax.conv_general_dilated(
        x_nchw, w, (stride, stride),
        [(padding, padding), (padding, padding)],
        dimension_numbers=("NCHW", "OIHW", "NCHW"))


def _ref_bn(x, bn, eps=1e-5):
    s = bn["gamma"] / jnp.sqrt(bn["var"] + eps)
    b = bn["beta"] - bn["mean"] * s
    return x * s[None, :, None, None] + b[None, :, None, None]


def bottleneck_ref(x, p):
    out = jax.nn.relu(_ref_bn(_ref_conv(x, p["conv1_w"], 1, 0), p["bn1"]))
    out = jax.nn.relu(_ref_bn(_ref_conv(out, p["conv2_w"], p["stride"], 1), p["bn2"]))
    out = _ref_bn(_ref_conv(out, p["conv3_w"], 1, 0), p["bn3"])
    if "sc_w" in p:
        sc = _ref_bn(_ref_conv(x, p["sc_w"], p["stride"], 0), p["sc_bn"])
    else:
        sc = x
    return jax.nn.relu(out + sc)


# ----------------------------------------------------------------------------
# Deterministic parameter construction
# ----------------------------------------------------------------------------
class KeyGen:
    def __init__(self, key):
        self.key = key

    def __call__(self):
        self.key, sub = jax.random.split(self.key)
        return sub


def make_bn(kg, c):
    return dict(
        gamma=1.0 + 0.1 * jax.random.normal(kg(), (c,), jnp.float32),
        beta=0.1 * jax.random.normal(kg(), (c,), jnp.float32),
        mean=0.1 * jax.random.normal(kg(), (c,), jnp.float32),
        var=1.0 + 0.1 * jnp.abs(jax.random.normal(kg(), (c,), jnp.float32)),
    )


def make_bottleneck_params(kg, in_planes, planes, stride, expansion=4):
    p = dict(
        stride=stride,
        conv1_w=0.1 * jax.random.normal(kg(), (planes, in_planes, 1, 1), jnp.float32),
        bn1=make_bn(kg, planes),
        conv2_w=0.1 * jax.random.normal(kg(), (planes, planes, 3, 3), jnp.float32),
        bn2=make_bn(kg, planes),
        conv3_w=0.1 * jax.random.normal(kg(), (expansion * planes, planes, 1, 1), jnp.float32),
        bn3=make_bn(kg, expansion * planes),
    )
    if stride != 1 or in_planes != expansion * planes:
        p["sc_w"] = 0.1 * jax.random.normal(
            kg(), (expansion * planes, in_planes, 1, 1), jnp.float32)
        p["sc_bn"] = make_bn(kg, expansion * planes)
    return p


# ----------------------------------------------------------------------------
if __name__ == "__main__":
    kg = KeyGen(jax.random.PRNGKey(0))

    # Block 1: projection shortcut (stride=2, channel change): 64 -> 4*32=128.
    p1 = make_bottleneck_params(kg, in_planes=64, planes=32, stride=2)
    # Block 2: identity shortcut (stride=1, in_planes == expansion*planes).
    p2 = make_bottleneck_params(kg, in_planes=128, planes=32, stride=1)

    # Pack weights once (BN fold + transpose + bf16 cast) — off the hot path.
    pk1 = prepare_block_params(p1)
    pk2 = prepare_block_params(p2)

    x = jax.random.normal(kg(), (2, 64, 16, 16), jnp.float32)

    @jax.jit
    def forward_two_blocks(x_nchw):
        # NCHW<->NHWC only at the model boundary; blocks chain in NHWC/bf16.
        xh = jnp.transpose(x_nchw, (0, 2, 3, 1)).astype(jnp.bfloat16)
        y1 = bottleneck_block_nhwc(xh, pk1)
        y2 = bottleneck_block_nhwc(y1, pk2)
        to_nchw = lambda t: jnp.transpose(t.astype(jnp.float32), (0, 3, 1, 2))
        return to_nchw(y1), to_nchw(y2)

    out1, out2 = forward_two_blocks(x)
    jax.block_until_ready((out1, out2))

    assert out1.shape == (2, 128, 8, 8), out1.shape
    assert out2.shape == (2, 128, 8, 8), out2.shape
    assert bool(jnp.all(jnp.isfinite(out1))) and bool(jnp.all(jnp.isfinite(out2)))

    # Compare against the pure-JAX f32 reference.  Matmul accumulation is f32;
    # only operands/intermediate storage are bf16 -> loose tolerance.
    ref1 = bottleneck_ref(x, p1)
    ref2 = bottleneck_ref(ref1, p2)
    err1 = float(jnp.max(jnp.abs(out1 - ref1)))
    err2 = float(jnp.max(jnp.abs(out2 - ref2)))
    assert err1 < 0.15, f"block1 max abs err {err1}"
    assert err2 < 0.15, f"block2 max abs err {err2}"

    print("KERNEL_OK")
</pallas_src>

<mosaic_0001>
module attributes {stable_mosaic.version = 11 : i64} {
  func.func @_matmul_bias_act_kernel(%arg0: i32, %arg1: memref<256x64xbf16, #tpu.memory_space<vmem>>, %arg2: memref<64x32xbf16, #tpu.memory_space<vmem>>, %arg3: memref<1x32xf32, #tpu.memory_space<vmem>>, %arg4: memref<256x32xbf16, #tpu.memory_space<vmem>>) attributes {dimension_semantics = [#tpu.dimension_semantics<parallel>], iteration_bounds = array<i64: 2>, scalar_prefetch = 0 : i64, scratch_operands = 0 : i64, tpu.core_type = #tpu.core_type<tc>, window_params = [{transform_indices = @transform_0, window_bounds = array<i64: 256, 64>}, {pipeline_mode = #tpu.pipeline_mode<synchronous>, transform_indices = @transform_1, window_bounds = array<i64: 64, 32>}, {pipeline_mode = #tpu.pipeline_mode<synchronous>, transform_indices = @transform_2, window_bounds = array<i64: 1, 32>}, {transform_indices = @transform_3, window_bounds = array<i64: 256, 32>}]} {
    %c0 = arith.constant 0 : index
    %c0_0 = arith.constant 0 : index
    %0 = vector.load %arg1[%c0, %c0_0] : memref<256x64xbf16, #tpu.memory_space<vmem>>, vector<256x64xbf16>
    %c0_1 = arith.constant 0 : index
    %c0_2 = arith.constant 0 : index
    %1 = vector.load %arg2[%c0_1, %c0_2] : memref<64x32xbf16, #tpu.memory_space<vmem>>, vector<64x32xbf16>
    %cst = arith.constant dense<0.000000e+00> : vector<256x32xf32>
    %2 = tpu.matmul %0, %1, %cst {dimension_numbers = #tpu.dot_dimension_numbers<[1], [0], [0], [1], [0, 0, 1, 1], [], []>} : vector<256x64xbf16>, vector<64x32xbf16>, vector<256x32xf32> -> vector<256x32xf32>
    %c0_3 = arith.constant 0 : index
    %c0_4 = arith.constant 0 : index
    %3 = vector.load %arg3[%c0_3, %c0_4] : memref<1x32xf32, #tpu.memory_space<vmem>>, vector<1x32xf32>
    %4 = vector.broadcast %3 : vector<1x32xf32> to vector<256x32xf32>
    %5 = arith.addf %2, %4 : vector<256x32xf32>
    %cst_5 = arith.constant 0.000000e+00 : f32
    %6 = vector.broadcast %cst_5 : f32 to vector<256x32xf32>
    %7 = arith.maximumf %5, %6 : vector<256x32xf32>
    %8 = arith.truncf %7 : vector<256x32xf32> to vector<256x32xbf16>
    %c0_6 = arith.constant 0 : index
    %c0_7 = arith.constant 0 : index
    %9 = vector.load %arg4[%c0_6, %c0_7] : memref<256x32xbf16, #tpu.memory_space<vmem>>, vector<256x32xbf16>
    tpu.vector_store %arg4[%c0_6, %c0_7], %8 {strides = array<i32>} : memref<256x32xbf16, #tpu.memory_space<vmem>>, vector<256x32xbf16>,
    return
  }
  func.func @transform_0(%arg0: i32) -> (i32, i32) {
    %c0_i32 = arith.constant 0 : i32
    %c0_i32_0 = arith.constant 0 : i32
    return %arg0, %c0_i32 : i32, i32
  }
  func.func @transform_1(%arg0: i32) -> (i32, i32) {
    %c0_i32 = arith.constant 0 : i32
    %c0_i32_0 = arith.constant 0 : i32
    %c0_i32_1 = arith.constant 0 : i32
    return %c0_i32, %c0_i32_0 : i32, i32
  }
  func.func @transform_2(%arg0: i32) -> (i32, i32) {
    %c0_i32 = arith.constant 0 : i32
    %c0_i32_0 = arith.constant 0 : i32
    %c0_i32_1 = arith.constant 0 : i32
    return %c0_i32, %c0_i32_0 : i32, i32
  }
  func.func @transform_3(%arg0: i32) -> (i32, i32) {
    %c0_i32 = arith.constant 0 : i32
    %c0_i32_0 = arith.constant 0 : i32
    return %arg0, %c0_i32 : i32, i32
  }
}

module attributes {stable_mosaic.version = 11 : i64} {
  func.func @_matmul_bias_act_kernel(%arg0: i32, %arg1: memref<128x128xbf16, #tpu.memory_space<vmem>>, %arg2: memref<128x32xbf16, #tpu.memory_space<vmem>>, %arg3: memref<1x32xf32, #tpu.memory_space<vmem>>, %arg4: memref<128x32xbf16, #tpu.memory_space<vmem>>) attributes {dimension_semantics = [#tpu.dimension_semantics<parallel>], iteration_bounds = array<i64: 1>, scalar_prefetch = 0 : i64, scratch_operands = 0 : i64, tpu.core_type = #tpu.core_type<tc>, window_params = [{transform_indices = @transform_0, window_bounds = array<i64: 128, 128>}, {pipeline_mode = #tpu.pipeline_mode<synchronous>, transform_indices = @transform_1, window_bounds = array<i64: 128, 32>}, {pipeline_mode = #tpu.pipeline_mode<synchronous>, transform_indices = @transform_2, window_bounds = array<i64: 1, 32>}, {transform_indices = @transform_3, window_bounds = array<i64: 128, 32>}]} {
    %c0 = arith.constant 0 : index
    %c0_0 = arith.constant 0 : index
    %0 = vector.load %arg1[%c0, %c0_0] : memref<128x128xbf16, #tpu.memory_space<vmem>>, vector<128x128xbf16>
    %c0_1 = arith.constant 0 : index
    %c0_2 = arith.constant 0 : index
    %1 = vector.load %arg2[%c0_1, %c0_2] : memref<128x32xbf16, #tpu.memory_space<vmem>>, vector<128x32xbf16>
    %cst = arith.constant dense<0.000000e+00> : vector<128x32xf32>
    %2 = tpu.matmul %0, %1, %cst {dimension_numbers = #tpu.dot_dimension_numbers<[1], [0], [0], [1], [0, 0, 1, 1], [], []>} : vector<128x128xbf16>, vector<128x32xbf16>, vector<128x32xf32> -> vector<128x32xf32>
    %c0_3 = arith.constant 0 : index
    %c0_4 = arith.constant 0 : index
    %3 = vector.load %arg3[%c0_3, %c0_4] : memref<1x32xf32, #tpu.memory_space<vmem>>, vector<1x32xf32>
    %4 = vector.broadcast %3 : vector<1x32xf32> to vector<128x32xf32>
    %5 = arith.addf %2, %4 : vector<128x32xf32>
    %cst_5 = arith.constant 0.000000e+00 : f32
    %6 = vector.broadcast %cst_5 : f32 to vector<128x32xf32>
    %7 = arith.maximumf %5, %6 : vector<128x32xf32>
    %8 = arith.truncf %7 : vector<128x32xf32> to vector<128x32xbf16>
    %c0_6 = arith.constant 0 : index
    %c0_7 = arith.constant 0 : index
    %9 = vector.load %arg4[%c0_6, %c0_7] : memref<128x32xbf16, #tpu.memory_space<vmem>>, vector<128x32xbf16>
    tpu.vector_store %arg4[%c0_6, %c0_7], %8 {strides = array<i32>} : memref<128x32xbf16, #tpu.memory_space<vmem>>, vector<128x32xbf16>,
    return
  }
  func.func @transform_0(%arg0: i32) -> (i32, i32) {
    %c0_i32 = arith.constant 0 : i32
    %c0_i32_0 = arith.constant 0 : i32
    return %arg0, %c0_i32 : i32, i32
  }
  func.func @transform_1(%arg0: i32) -> (i32, i32) {
    %c0_i32 = arith.constant 0 : i32
    %c0_i32_0 = arith.constant 0 : i32
    %c0_i32_1 = arith.constant 0 : i32
    return %c0_i32, %c0_i32_0 : i32, i32
  }
  func.func @transform_2(%arg0: i32) -> (i32, i32) {
    %c0_i32 = arith.constant 0 : i32
    %c0_i32_0 = arith.constant 0 : i32
    %c0_i32_1 = arith.constant 0 : i32
    return %c0_i32, %c0_i32_0 : i32, i32
  }
  func.func @transform_3(%arg0: i32) -> (i32, i32) {
    %c0_i32 = arith.constant 0 : i32
    %c0_i32_0 = arith.constant 0 : i32
    return %arg0, %c0_i32 : i32, i32
  }
}

module attributes {stable_mosaic.version = 11 : i64} {
  func.func @_bottleneck_tail_kernel(%arg0: i32, %arg1: memref<128x288xbf16, #tpu.memory_space<vmem>>, %arg2: memref<288x32xbf16, #tpu.memory_space<vmem>>, %arg3: memref<1x32xf32, #tpu.memory_space<vmem>>, %arg4: memref<32x128xbf16, #tpu.memory_space<vmem>>, %arg5: memref<1x128xf32, #tpu.memory_space<vmem>>, %arg6: memref<128x64xbf16, #tpu.memory_space<vmem>>, %arg7: memref<64x128xbf16, #tpu.memory_space<vmem>>, %arg8: memref<1x128xf32, #tpu.memory_space<vmem>>, %arg9: memref<128x128xbf16, #tpu.memory_space<vmem>>) attributes {dimension_semantics = [#tpu.dimension_semantics<parallel>], iteration_bounds = array<i64: 1>, scalar_prefetch = 0 : i64, scratch_operands = 0 : i64, tpu.core_type = #tpu.core_type<tc>, window_params = [{transform_indices = @transform_0, window_bounds = array<i64: 128, 288>}, {pipeline_mode = #tpu.pipeline_mode<synchronous>, transform_indices = @transform_1, window_bounds = array<i64: 288, 32>}, {pipeline_mode = #tpu.pipeline_mode<synchronous>, transform_indices = @transform_2, window_bounds = array<i64: 1, 32>}, {pipeline_mode = #tpu.pipeline_mode<synchronous>, transform_indices = @transform_3, window_bounds = array<i64: 32, 128>}, {pipeline_mode = #tpu.pipeline_mode<synchronous>, transform_indices = @transform_4, window_bounds = array<i64: 1, 128>}, {transform_indices = @transform_5, window_bounds = array<i64: 128, 64>}, {pipeline_mode = #tpu.pipeline_mode<synchronous>, transform_indices = @transform_6, window_bounds = array<i64: 64, 128>}, {pipeline_mode = #tpu.pipeline_mode<synchronous>, transform_indices = @transform_7, window_bounds = array<i64: 1, 128>}, {transform_indices = @transform_8, window_bounds = array<i64: 128, 128>}]} {
    %c0 = arith.constant 0 : index
    %c0_0 = arith.constant 0 : index
    %0 = vector.load %arg1[%c0, %c0_0] : memref<128x288xbf16, #tpu.memory_space<vmem>>, vector<128x288xbf16>
    %c0_1 = arith.constant 0 : index
    %c0_2 = arith.constant 0 : index
    %1 = vector.load %arg2[%c0_1, %c0_2] : memref<288x32xbf16, #tpu.memory_space<vmem>>, vector<288x32xbf16>
    %cst = arith.constant dense<0.000000e+00> : vector<128x32xf32>
    %2 = tpu.matmul %0, %1, %cst {dimension_numbers = #tpu.dot_dimension_numbers<[1], [0], [0], [1], [0, 0, 1, 1], [], []>} : vector<128x288xbf16>, vector<288x32xbf16>, vector<128x32xf32> -> vector<128x32xf32>
    %c0_3 = arith.constant 0 : index
    %c0_4 = arith.constant 0 : index
    %3 = vector.load %arg3[%c0_3, %c0_4] : memref<1x32xf32, #tpu.memory_space<vmem>>, vector<1x32xf32>
    %4 = vector.broadcast %3 : vector<1x32xf32> to vector<128x32xf32>
    %5 = arith.addf %2, %4 : vector<128x32xf32>
    %cst_5 = arith.constant 0.000000e+00 : f32
    %6 = vector.broadcast %cst_5 : f32 to vector<128x32xf32>
    %7 = arith.maximumf %5, %6 : vector<128x32xf32>
    %8 = arith.truncf %7 : vector<128x32xf32> to vector<128x32xbf16>
    %c0_6 = arith.constant 0 : index
    %c0_7 = arith.constant 0 : index
    %9 = vector.load %arg4[%c0_6, %c0_7] : memref<32x128xbf16, #tpu.memory_space<vmem>>, vector<32x128xbf16>
    %cst_8 = arith.constant dense<0.000000e+00> : vector<128x128xf32>
    %10 = tpu.matmul %8, %9, %cst_8 {dimension_numbers = #tpu.dot_dimension_numbers<[1], [0], [0], [1], [0, 0, 1, 1], [], []>} : vector<128x32xbf16>, vector<32x128xbf16>, vector<128x128xf32> -> vector<128x128xf32>
    %c0_9 = arith.constant 0 : index
    %c0_10 = arith.constant 0 : index
    %11 = vector.load %arg5[%c0_9, %c0_10] : memref<1x128xf32, #tpu.memory_space<vmem>>, vector<1x128xf32>
    %12 = vector.broadcast %11 : vector<1x128xf32> to vector<128x128xf32>
    %13 = arith.addf %10, %12 : vector<128x128xf32>
    %c0_11 = arith.constant 0 : index
    %c0_12 = arith.constant 0 : index
    %14 = vector.load %arg6[%c0_11, %c0_12] : memref<128x64xbf16, #tpu.memory_space<vmem>>, vector<128x64xbf16>
    %c0_13 = arith.constant 0 : index
    %c0_14 = arith.constant 0 : index
    %15 = vector.load %arg7[%c0_13, %c0_14] : memref<64x128xbf16, #tpu.memory_space<vmem>>, vector<64x128xbf16>
    %cst_15 = arith.constant dense<0.000000e+00> : vector<128x128xf32>
    %16 = tpu.matmul %14, %15, %cst_15 {dimension_numbers = #tpu.dot_dimension_numbers<[1], [0], [0], [1], [0, 0, 1, 1], [], []>} : vector<128x64xbf16>, vector<64x128xbf16>, vector<128x128xf32> -> vector<128x128xf32>
    %17 = arith.addf %13, %16 : vector<128x128xf32>
    %c0_16 = arith.constant 0 : index
    %c0_17 = arith.constant 0 : index
    %18 = vector.load %arg8[%c0_16, %c0_17] : memref<1x128xf32, #tpu.memory_space<vmem>>, vector<1x128xf32>
    %19 = vector.broadcast %18 : vector<1x128xf32> to vector<128x128xf32>
    %20 = arith.addf %17, %19 : vector<128x128xf32>
    %cst_18 = arith.constant 0.000000e+00 : f32
    %21 = vector.broadcast %cst_18 : f32 to vector<128x128xf32>
    %22 = arith.maximumf %20, %21 : vector<128x128xf32>
    %23 = arith.truncf %22 : vector<128x128xf32> to vector<128x128xbf16>
    %c0_19 = arith.constant 0 : index
    %c0_20 = arith.constant 0 : index
    %24 = vector.load %arg9[%c0_19, %c0_20] : memref<128x128xbf16, #tpu.memory_space<vmem>>, vector<128x128xbf16>
    tpu.vector_store %arg9[%c0_19, %c0_20], %23 {strides = array<i32>} : memref<128x128xbf16, #tpu.memory_space<vmem>>, vector<128x128xbf16>,
    return
  }
  func.func @transform_0(%arg0: i32) -> (i32, i32) {
    %c0_i32 = arith.constant 0 : i32
    %c0_i32_0 = arith.constant 0 : i32
    return %arg0, %c0_i32 : i32, i32
  }
  func.func @transform_1(%arg0: i32) -> (i32, i32) {
    %c0_i32 = arith.constant 0 : i32
    %c0_i32_0 = arith.constant 0 : i32
    %c0_i32_1 = arith.constant 0 : i32
    return %c0_i32, %c0_i32_0 : i32, i32
  }
  func.func @transform_2(%arg0: i32) -> (i32, i32) {
    %c0_i32 = arith.constant 0 : i32
    %c0_i32_0 = arith.constant 0 : i32
    %c0_i32_1 = arith.constant 0 : i32
    return %c0_i32, %c0_i32_0 : i32, i32
  }
  func.func @transform_3(%arg0: i32) -> (i32, i32) {
    %c0_i32 = arith.constant 0 : i32
    %c0_i32_0 = arith.constant 0 : i32
    %c0_i32_1 = arith.constant 0 : i32
    return %c0_i32, %c0_i32_0 : i32, i32
  }
  func.func @transform_4(%arg0: i32) -> (i32, i32) {
    %c0_i32 = arith.constant 0 : i32
    %c0_i32_0 = arith.constant 0 : i32
    %c0_i32_1 = arith.constant 0 : i32
    return %c0_i32, %c0_i32_0 : i32, i32
  }
  func.func @transform_5(%arg0: i32) -> (i32, i32) {
    %c0_i32 = arith.constant 0 : i32
    %c0_i32_0 = arith.constant 0 : i32
    return %arg0, %c0_i32 : i32, i32
  }
  func.func @transform_6(%arg0: i32) -> (i32, i32) {
    %c0_i32 = arith.constant 0 : i32
    %c0_i32_0 = arith.constant 0 : i32
    %c0_i32_1 = arith.constant 0 : i32
    return %c0_i32, %c0_i32_0 : i32, i32
  }
  func.func @transform_7(%arg0: i32) -> (i32, i32) {
    %c0_i32 = arith.constant 0 : i32
    %c0_i32_0 = arith.constant 0 : i32
    %c0_i32_1 = arith.constant 0 : i32
    return %c0_i32, %c0_i32_0 : i32, i32
  }
  func.func @transform_8(%arg0: i32) -> (i32, i32) {
    %c0_i32 = arith.constant 0 : i32
    %c0_i32_0 = arith.constant 0 : i32
    return %arg0, %c0_i32 : i32, i32
  }
}

module attributes {stable_mosaic.version = 11 : i64} {
  func.func @_bottleneck_tail_kernel(%arg0: i32, %arg1: memref<128x288xbf16, #tpu.memory_space<vmem>>, %arg2: memref<288x32xbf16, #tpu.memory_space<vmem>>, %arg3: memref<1x32xf32, #tpu.memory_space<vmem>>, %arg4: memref<32x128xbf16, #tpu.memory_space<vmem>>, %arg5: memref<1x128xf32, #tpu.memory_space<vmem>>, %arg6: memref<128x128xbf16, #tpu.memory_space<vmem>>, %arg7: memref<128x128xbf16, #tpu.memory_space<vmem>>) attributes {dimension_semantics = [#tpu.dimension_semantics<parallel>], iteration_bounds = array<i64: 1>, scalar_prefetch = 0 : i64, scratch_operands = 0 : i64, tpu.core_type = #tpu.core_type<tc>, window_params = [{transform_indices = @transform_0, window_bounds = array<i64: 128, 288>}, {pipeline_mode = #tpu.pipeline_mode<synchronous>, transform_indices = @transform_1, window_bounds = array<i64: 288, 32>}, {pipeline_mode = #tpu.pipeline_mode<synchronous>, transform_indices = @transform_2, window_bounds = array<i64: 1, 32>}, {pipeline_mode = #tpu.pipeline_mode<synchronous>, transform_indices = @transform_3, window_bounds = array<i64: 32, 128>}, {pipeline_mode = #tpu.pipeline_mode<synchronous>, transform_indices = @transform_4, window_bounds = array<i64: 1, 128>}, {transform_indices = @transform_5, window_bounds = array<i64: 128, 128>}, {transform_indices = @transform_6, window_bounds = array<i64: 128, 128>}]} {
    %c0 = arith.constant 0 : index
    %c0_0 = arith.constant 0 : index
    %0 = vector.load %arg1[%c0, %c0_0] : memref<128x288xbf16, #tpu.memory_space<vmem>>, vector<128x288xbf16>
    %c0_1 = arith.constant 0 : index
    %c0_2 = arith.constant 0 : index
    %1 = vector.load %arg2[%c0_1, %c0_2] : memref<288x32xbf16, #tpu.memory_space<vmem>>, vector<288x32xbf16>
    %cst = arith.constant dense<0.000000e+00> : vector<128x32xf32>
    %2 = tpu.matmul %0, %1, %cst {dimension_numbers = #tpu.dot_dimension_numbers<[1], [0], [0], [1], [0, 0, 1, 1], [], []>} : vector<128x288xbf16>, vector<288x32xbf16>, vector<128x32xf32> -> vector<128x32xf32>
    %c0_3 = arith.constant 0 : index
    %c0_4 = arith.constant 0 : index
    %3 = vector.load %arg3[%c0_3, %c0_4] : memref<1x32xf32, #tpu.memory_space<vmem>>, vector<1x32xf32>
    %4 = vector.broadcast %3 : vector<1x32xf32> to vector<128x32xf32>
    %5 = arith.addf %2, %4 : vector<128x32xf32>
    %cst_5 = arith.constant 0.000000e+00 : f32
    %6 = vector.broadcast %cst_5 : f32 to vector<128x32xf32>
    %7 = arith.maximumf %5, %6 : vector<128x32xf32>
    %8 = arith.truncf %7 : vector<128x32xf32> to vector<128x32xbf16>
    %c0_6 = arith.constant 0 : index
    %c0_7 = arith.constant 0 : index
    %9 = vector.load %arg4[%c0_6, %c0_7] : memref<32x128xbf16, #tpu.memory_space<vmem>>, vector<32x128xbf16>
    %cst_8 = arith.constant dense<0.000000e+00> : vector<128x128xf32>
    %10 = tpu.matmul %8, %9, %cst_8 {dimension_numbers = #tpu.dot_dimension_numbers<[1], [0], [0], [1], [0, 0, 1, 1], [], []>} : vector<128x32xbf16>, vector<32x128xbf16>, vector<128x128xf32> -> vector<128x128xf32>
    %c0_9 = arith.constant 0 : index
    %c0_10 = arith.constant 0 : index
    %11 = vector.load %arg5[%c0_9, %c0_10] : memref<1x128xf32, #tpu.memory_space<vmem>>, vector<1x128xf32>
    %12 = vector.broadcast %11 : vector<1x128xf32> to vector<128x128xf32>
    %13 = arith.addf %10, %12 : vector<128x128xf32>
    %c0_11 = arith.constant 0 : index
    %c0_12 = arith.constant 0 : index
    %14 = vector.load %arg6[%c0_11, %c0_12] : memref<128x128xbf16, #tpu.memory_space<vmem>>, vector<128x128xbf16>
    %15 = arith.extf %14 : vector<128x128xbf16> to vector<128x128xf32>
    %16 = arith.addf %13, %15 : vector<128x128xf32>
    %cst_13 = arith.constant 0.000000e+00 : f32
    %17 = vector.broadcast %cst_13 : f32 to vector<128x128xf32>
    %18 = arith.maximumf %16, %17 : vector<128x128xf32>
    %19 = arith.truncf %18 : vector<128x128xf32> to vector<128x128xbf16>
    %c0_14 = arith.constant 0 : index
    %c0_15 = arith.constant 0 : index
    %20 = vector.load %arg7[%c0_14, %c0_15] : memref<128x128xbf16, #tpu.memory_space<vmem>>, vector<128x128xbf16>
    tpu.vector_store %arg7[%c0_14, %c0_15], %19 {strides = array<i32>} : memref<128x128xbf16, #tpu.memory_space<vmem>>, vector<128x128xbf16>,
    return
  }
  func.func @transform_0(%arg0: i32) -> (i32, i32) {
    %c0_i32 = arith.constant 0 : i32
    %c0_i32_0 = arith.constant 0 : i32
    return %arg0, %c0_i32 : i32, i32
  }
  func.func @transform_1(%arg0: i32) -> (i32, i32) {
    %c0_i32 = arith.constant 0 : i32
    %c0_i32_0 = arith.constant 0 : i32
    %c0_i32_1 = arith.constant 0 : i32
    return %c0_i32, %c0_i32_0 : i32, i32
  }
  func.func @transform_2(%arg0: i32) -> (i32, i32) {
    %c0_i32 = arith.constant 0 : i32
    %c0_i32_0 = arith.constant 0 : i32
    %c0_i32_1 = arith.constant 0 : i32
    return %c0_i32, %c0_i32_0 : i32, i32
  }
  func.func @transform_3(%arg0: i32) -> (i32, i32) {
    %c0_i32 = arith.constant 0 : i32
    %c0_i32_0 = arith.constant 0 : i32
    %c0_i32_1 = arith.constant 0 : i32
    return %c0_i32, %c0_i32_0 : i32, i32
  }
  func.func @transform_4(%arg0: i32) -> (i32, i32) {
    %c0_i32 = arith.constant 0 : i32
    %c0_i32_0 = arith.constant 0 : i32
    %c0_i32_1 = arith.constant 0 : i32
    return %c0_i32, %c0_i32_0 : i32, i32
  }
  func.func @transform_5(%arg0: i32) -> (i32, i32) {
    %c0_i32 = arith.constant 0 : i32
    %c0_i32_0 = arith.constant 0 : i32
    return %arg0, %c0_i32 : i32, i32
  }
  func.func @transform_6(%arg0: i32) -> (i32, i32) {
    %c0_i32 = arith.constant 0 : i32
    %c0_i32_0 = arith.constant 0 : i32
    return %arg0, %c0_i32 : i32, i32
  }
}

</mosaic_0001>

<llo_original>
// kernel: forward_two_blocks.4
$region0: #{forward_two_blocks.4}
  #allocation0 [shape = 'u32[]', space=smem, size = 0x4, offset = 0x4, fixed_abs, tag = 'smem constant byte address 0x4 - core index']
  #allocation1 [shape = 'u32[72,128]{1,0:T(1,128)}', space=vmem, size = 0x9000, scoped, tag = 'internal scratch']
  %s0 = inlined_call_operand.vmem [shape: bf16[512,64], index: 0, kind: input, shape index: {}]
  %s1 = inlined_call_operand.vmem [shape: bf16[64,32], index: 1, kind: input, shape index: {}]
  %s2 = inlined_call_operand.vmem [shape: f32[1,32], index: 2, kind: input, shape index: {}]
  %s3 = inlined_call_operand.vmem [shape: bf16[512,32], index: 3, kind: output, shape index: {}]
  %s4 = sld [smem:[#allocation0]]
  $region45: #{forward_two_blocks.4} parent=0
    _
  %s6 = ssub.s32 1, %s4
  %s7 = scalar_select 0, %s6, %s4
  loop: start=0, step=1, limit=4
  $region2: #{forward_two_blocks.4} parent=0 // loop_pre_header
    _
  $region3: #{forward_two_blocks.4} parent=0 // loop_header
    %s9 = sphi 0, %s13
    %p10 = scmp.ge.s32.totalorder %s9, 4
    %s19 = sphi 0, %s21
    %s22 = sphi 0, %s19
    %s23 = sphi 0, %s22
    %s39 = sphi 0, %s23
    %s43 = sphi 0, %s43
    %s45 = sphi 0, %s43
    %s46 = sphi 0, %s45
    %s60 = sphi 0, %s46
    %s64 = sphi 0, %s64
    %s66 = sphi 0, %s64
    %s67 = sphi 0, %s66
    %s81 = sphi 0, %s67
    %s87 = sphi 0, %s89
    %s90 = sphi 0, %s87
    %s91 = sphi 0, %s90
    %s107 = sphi 0, %s91
  $region4: #{forward_two_blocks.4} parent=0 // loop_header_branch
    %12 = sbr.rel (%p10) target = $region8
  $region5: #{forward_two_blocks.4} parent=0 // loop_body
    %s14 = ssub.s32 %s9, 1
    %s15 = ssub.s32 %s9, 2
    %s16 = sadd.s32 %s9, 1
    %s17 = ssub.s32 %s9, %s16
    %p18 = scmp.eq.s32.totalorder %s17, 0
    %s20 = sadd.s32 %s19, 1
    %s21 = scalar_select %p18, %s19, %s20
    %p24 = pneg %p18
    %p25 = scmp.eq.s32.totalorder %s9, 1
    %p26 = por %p24, %p25
    %p27 = scmp.ne.s32.totalorder %s19, %s22
    %p28 = scmp.eq.s32.totalorder %s9, 0
    %p29 = por %p27, %p28
    %p30 = scmp.ne.s32.totalorder %s19, %s22
    %p31 = scmp.eq.s32.totalorder %s14, 1
    %p32 = por %p30, %p31
    %p33 = scmp.ne.s32.totalorder %s22, %s23
    %p34 = scmp.eq.s32.totalorder %s14, 0
    %p35 = por %p33, %p34
    %p36 = scmp.ne.s32.totalorder %s22, %s23
    %p37 = scmp.eq.s32.totalorder %s15, 1
    %p38 = por %p36, %p37
    %p40 = scmp.ne.s32.totalorder %s23, %s39
    %p41 = scmp.eq.s32.totalorder %s15, 0
    %p42 = por %p40, %p41
    %s44 = sadd.s32 %s43, 1
    %p47 = scmp.eq.s32.totalorder %s9, 1
    %p48 = scmp.ne.s32.totalorder %s43, %s45
    %p49 = scmp.eq.s32.totalorder %s9, 0
    %p50 = por %p48, %p49
    %p51 = scmp.ne.s32.totalorder %s43, %s45
    %p52 = scmp.eq.s32.totalorder %s14, 1
    %p53 = por %p51, %p52
    %p54 = scmp.ne.s32.totalorder %s45, %s46
    %p55 = scmp.eq.s32.totalorder %s14, 0
    %p56 = por %p54, %p55
    %p57 = scmp.ne.s32.totalorder %s45, %s46
    %p58 = scmp.eq.s32.totalorder %s15, 1
    %p59 = por %p57, %p58
    %p61 = scmp.ne.s32.totalorder %s46, %s60
    %p62 = scmp.eq.s32.totalorder %s15, 0
    %p63 = por %p61, %p62
    %s65 = sadd.s32 %s64, 1
    %p68 = scmp.eq.s32.totalorder %s9, 1
    %p69 = scmp.ne.s32.totalorder %s64, %s66
    %p70 = scmp.eq.s32.totalorder %s9, 0
    %p71 = por %p69, %p70
    %p72 = scmp.ne.s32.totalorder %s64, %s66
    %p73 = scmp.eq.s32.totalorder %s14, 1
    %p74 = por %p72, %p73
    %p75 = scmp.ne.s32.totalorder %s66, %s67
    %p76 = scmp.eq.s32.totalorder %s14, 0
    %p77 = por %p75, %p76
    %p78 = scmp.ne.s32.totalorder %s66, %s67
    %p79 = scmp.eq.s32.totalorder %s15, 1
    %p80 = por %p78, %p79
    %p82 = scmp.ne.s32.totalorder %s67, %s81
    %p83 = scmp.eq.s32.totalorder %s15, 0
    %p84 = por %p82, %p83
    %s85 = ssub.s32 %s9, %s16
    %p86 = scmp.eq.s32.totalorder %s85, 0
    %s88 = sadd.s32 %s87, 1
    %s89 = scalar_select %p86, %s87, %s88
    %p92 = pneg %p86
    %p93 = scmp.eq.s32.totalorder %s9, 1
    %p94 = por %p92, %p93
    %p95 = scmp.ne.s32.totalorder %s87, %s90
    %p96 = scmp.eq.s32.totalorder %s9, 0
    %p97 = por %p95, %p96
    %p98 = scmp.ne.s32.totalorder %s87, %s90
    %p99 = scmp.eq.s32.totalorder %s14, 1
    %p100 = por %p98, %p99
    %p101 = scmp.ne.s32.totalorder %s90, %s91
    %p102 = scmp.eq.s32.totalorder %s14, 0
    %p103 = por %p101, %p102
    %p104 = scmp.ne.s32.totalorder %s90, %s91
    %p105 = scmp.eq.s32.totalorder %s15, 1
    %p106 = por %p104, %p105
    %p108 = scmp.ne.s32.totalorder %s91, %s107
    %p109 = scmp.eq.s32.totalorder %s15, 0
    %p110 = por %p108, %p109
    %p111 = scmp.le.s32.totalorder 1, %s9
    %p112 = scmp.lt.s32.totalorder %s9, 3
    %p113 = pnand %p111, %p112
    %p114 = pneg %p113
    // Predicated region
    $region9: #{forward_two_blocks.4} parent=5 // pred_check
      _
    $region10: #{forward_two_blocks.4} parent=5 // pred_check_branch
      %116 = sbr.rel (%p113) target = $region12
    $region11: #{forward_two_blocks.4} parent=5 // pred_region
      %s117 = ssub.s32 %s9, 1
      // Predicated region
      $region13: #{forward_two_blocks.4} parent=11 // pred_check
        %p118 = pneg %p56
      $region14: #{forward_two_blocks.4} parent=11 // pred_check_branch
        %120 = sbr.rel (%p118) target = $region16
      $region15: #{forward_two_blocks.4} parent=11 // pred_region
        _
      $region16: #{forward_two_blocks.4} parent=11 // pred_fallthru
        _
      // Predicated region
      $region17: #{forward_two_blocks.4} parent=11 // pred_check
        %p121 = pneg %p77
      $region18: #{forward_two_blocks.4} parent=11 // pred_check_branch
        %123 = sbr.rel (%p121) target = $region20
      $region19: #{forward_two_blocks.4} parent=11 // pred_region
        _
      $region20: #{forward_two_blocks.4} parent=11 // pred_fallthru
        _
    $region12: #{forward_two_blocks.4} parent=5 // pred_fallthru
      _
    %p124 = scmp.lt.s32.totalorder %s9, 2
    // Predicated region
    $region21: #{forward_two_blocks.4} parent=5 // pred_check
      %p125 = pneg %p124
    $region22: #{forward_two_blocks.4} parent=5 // pred_check_branch
      %127 = sbr.rel (%p125) target = $region24
    $region23: #{forward_two_blocks.4} parent=5 // pred_region
      // Predicated region
      $region25: #{forward_two_blocks.4} parent=23 // pred_check
        %p128 = pneg %p29
      $region26: #{forward_two_blocks.4} parent=23 // pred_check_branch
        %130 = sbr.rel (%p128) target = $region28
      $region27: #{forward_two_blocks.4} parent=23 // pred_region
        %s131 = smul.u32 32, %s9
        %p132 = scmp.lt.s32.totalorder %s131, 63
        %s133 = scalar_select %p132, %s131, 63
        %s134 = smul.addr %s133, 4
        %s135 = scalar_lea.vmem %s0, %s134
        %s136 = smul.u32 32, %s9
      $region28: #{forward_two_blocks.4} parent=23 // pred_fallthru
        _
    $region24: #{forward_two_blocks.4} parent=5 // pred_fallthru
      _
    %p137 = scmp.le.s32.totalorder 1, %s9
    %p138 = scmp.lt.s32.totalorder %s9, 3
    %p139 = pnand %p137, %p138
    %p140 = pneg %p139
    // Predicated region
    $region29: #{forward_two_blocks.4} parent=5 // pred_check
      _
    $region30: #{forward_two_blocks.4} parent=5 // pred_check_branch
      %142 = sbr.rel (%p139) target = $region32
    $region31: #{forward_two_blocks.4} parent=5 // pred_region
      %s143 = ssub.s32 %s9, 1
      %s144 = smul.u32 32, %s14
      %p145 = scmp.lt.s32.totalorder %s144, 63
      %s146 = scalar_select %p145, %s144, 63
      %s147 = smul.addr %s146, 4
      %s148 = scalar_lea.vmem %s0, %s147
      %p149 = pneg %p35
      %p150 = pneg %p32
      %p151 = pneg %p56
      %p152 = pneg %p53
      %p153 = pneg %p77
      %p154 = pneg %p74
      %p155 = pneg %p103
      %p156 = pneg %p100
      %s157 = smul.u32 32, %s14
      %p158 = scmp.lt.s32.totalorder %s157, 63
      %s159 = scalar_select %p158, %s157, 63
      %s160 = smul.addr %s159, 4
      %s161 = scalar_lea.vmem %s3, %s160
      %s162 = smul.u32 32, %s14
      %p163 = scmp.lt.s32.totalorder %s162, 63
      %s164 = scalar_select %p163, %s162, 63
      %s165 = smul.addr %s164, 4
      %s166 = scalar_lea.vmem %s0, %s165
      %s167 = smul.u32 32, %s14
      %s168 = smul.u32 32, %s14
      %p169 = scmp.lt.s32.totalorder %s168, 63
      %s170 = scalar_select %p169, %s168, 63
      %s171 = smul.addr %s170, 4
      %s172 = scalar_lea.vmem %s3, %s171
      %s173 = smul.u32 32, %s14
      %v175 = vld [vmem:[%s166] sm:$0xf]
      %v176 = vld [vmem:[%s166 + $0x4] sm:$0xf]
      %v177 = vld [vmem:[%s166 + $0x8] sm:$0xf]
      %v178 = vld [vmem:[%s166 + $0xc] sm:$0xf]
      %v179 = vld [vmem:[%s166 + $0x10] sm:$0xf]
      %v180 = vld [vmem:[%s166 + $0x14] sm:$0xf]
      %v181 = vld [vmem:[%s166 + $0x18] sm:$0xf]
      %v182 = vld [vmem:[%s166 + $0x1c] sm:$0xf]
      %v183 = vld [vmem:[%s166 + $0x20] sm:$0xf]
      %v184 = vld [vmem:[%s166 + $0x24] sm:$0xf]
      %v185 = vld [vmem:[%s166 + $0x28] sm:$0xf]
      %v186 = vld [vmem:[%s166 + $0x2c] sm:$0xf]
      %v187 = vld [vmem:[%s166 + $0x30] sm:$0xf]
      %v188 = vld [vmem:[%s166 + $0x34] sm:$0xf]
      %v189 = vld [vmem:[%s166 + $0x38] sm:$0xf]
      %v190 = vld [vmem:[%s166 + $0x3c] sm:$0xf]
      %v191 = vld [vmem:[%s166 + $0x40] sm:$0xf]
      %v192 = vld [vmem:[%s166 + $0x44] sm:$0xf]
      %v193 = vld [vmem:[%s166 + $0x48] sm:$0xf]
      %v194 = vld [vmem:[%s166 + $0x4c] sm:$0xf]
      %v195 = vld [vmem:[%s166 + $0x50] sm:$0xf]
      %v196 = vld [vmem:[%s166 + $0x54] sm:$0xf]
      %v197 = vld [vmem:[%s166 + $0x58] sm:$0xf]
      %v198 = vld [vmem:[%s166 + $0x5c] sm:$0xf]
      %v199 = vld [vmem:[%s166 + $0x60] sm:$0xf]
      %v200 = vld [vmem:[%s166 + $0x64] sm:$0xf]
      %v201 = vld [vmem:[%s166 + $0x68] sm:$0xf]
      %v202 = vld [vmem:[%s166 + $0x6c] sm:$0xf]
      %v203 = vld [vmem:[%s166 + $0x70] sm:$0xf]
      %v204 = vld [vmem:[%s166 + $0x74] sm:$0xf]
      %v205 = vld [vmem:[%s166 + $0x78] sm:$0xf]
      %v206 = vld [vmem:[%s166 + $0x7c] sm:$0xf]
      %v207 = vld [vmem:[%s1] sm:$0xf]
      %v208 = vld [vmem:[%s1 + $0x4] sm:$0xf]
      %v209 = vld [vmem:[%s1 + $0x8] sm:$0xf]
      %v210 = vld [vmem:[%s1 + $0xc] sm:$0xf]
      %v211 = vld [vmem:[%s1 + $0x10] sm:$0xf]
      %v212 = vld [vmem:[%s1 + $0x14] sm:$0xf]
      %v213 = vld [vmem:[%s1 + $0x18] sm:$0xf]
      %v214 = vld [vmem:[%s1 + $0x1c] sm:$0xf]
      %v215 = vld [vmem:[%s2] sm:$0x1]
      %v217 = vperm.slane %v215, 0
      %v251 = vunpack.c.l.b16 %v175
      %v252 = vunpack.c.l.b16 %v176
      %v253 = vunpack.c.l.b16 %v177
      %v254 = vunpack.c.l.b16 %v178
      %v255 = vunpack.c.l.b16 %v179
      %v256 = vunpack.c.l.b16 %v180
      %v257 = vunpack.c.l.b16 %v181
      %v258 = vunpack.c.l.b16 %v182
      %v259 = vunpack.c.l.b16 %v183
      %v260 = vunpack.c.l.b16 %v184
      %v261 = vunpack.c.l.b16 %v185
      %v262 = vunpack.c.l.b16 %v186
      %v263 = vunpack.c.l.b16 %v187
      %v264 = vunpack.c.l.b16 %v188
      %v265 = vunpack.c.l.b16 %v189
      %v266 = vunpack.c.l.b16 %v190
      %v267 = vunpack.c.l.b16 %v191
      %v268 = vunpack.c.l.b16 %v192
      %v269 = vunpack.c.l.b16 %v193
      %v270 = vunpack.c.l.b16 %v194
      %v271 = vunpack.c.l.b16 %v195
      %v272 = vunpack.c.l.b16 %v196
      %v273 = vunpack.c.l.b16 %v197
      %v274 = vunpack.c.l.b16 %v198
      %v275 = vunpack.c.l.b16 %v199
      %v276 = vunpack.c.l.b16 %v200
      %v277 = vunpack.c.l.b16 %v201
      %v278 = vunpack.c.l.b16 %v202
      %v279 = vunpack.c.l.b16 %v203
      %v280 = vunpack.c.l.b16 %v204
      %v281 = vunpack.c.l.b16 %v205
      %v282 = vunpack.c.l.b16 %v206
      %v283 = vpack.c.b16 %v252, %v251
      %v284 = vpack.c.b16 %v254, %v253
      %v285 = vpack.c.b16 %v256, %v255
      %v286 = vpack.c.b16 %v258, %v257
      %v287 = vpack.c.b16 %v260, %v259
      %v288 = vpack.c.b16 %v262, %v261
      %v289 = vpack.c.b16 %v264, %v263
      %v290 = vpack.c.b16 %v266, %v265
      %v291 = vpack.c.b16 %v268, %v267
      %v292 = vpack.c.b16 %v270, %v269
      %v293 = vpack.c.b16 %v272, %v271
      %v294 = vpack.c.b16 %v274, %v273
      %v295 = vpack.c.b16 %v276, %v275
      %v296 = vpack.c.b16 %v278, %v277
      %v297 = vpack.c.b16 %v280, %v279
      %v298 = vpack.c.b16 %v282, %v281
      %v307 = vunpack.c.l.b16 %v207
      %v308 = vunpack.c.l.b16 %v208
      %v309 = vunpack.c.l.b16 %v209
      %v310 = vunpack.c.l.b16 %v210
      %v311 = vunpack.c.l.b16 %v211
      %v312 = vunpack.c.l.b16 %v212
      %v313 = vunpack.c.l.b16 %v213
      %v314 = vunpack.c.l.b16 %v214
      %v315 = vpack.c.b16 %v308, %v307
      %v316 = vpack.c.b16 %v310, %v309
      %v317 = vpack.c.b16 %v312, %v311
      %v318 = vpack.c.b16 %v314, %v313
      %vm323 = vcmask 523264
      %v325 = vsel %vm323, %v283, 0
      %v328 = vsel %vm323, %v284, 0
      %v331 = vsel %vm323, %v285, 0
      %v334 = vsel %vm323, %v286, 0
      %v337 = vsel %vm323, %v287, 0
      %v340 = vsel %vm323, %v288, 0
      %v343 = vsel %vm323, %v289, 0
      %v346 = vsel %vm323, %v290, 0
      %v349 = vsel %vm323, %v291, 0
      %v352 = vsel %vm323, %v292, 0
      %v355 = vsel %vm323, %v293, 0
      %v358 = vsel %vm323, %v294, 0
      %v361 = vsel %vm323, %v295, 0
      %v364 = vsel %vm323, %v296, 0
      %v367 = vsel %vm323, %v297, 0
      %v370 = vsel %vm323, %v298, 0
      %372 = vmatpush.bf16.msra.mxu0 0
      %373 = vmatpush.bf16.msra.mxu0 0
      %374 = vmatpush.bf16.msra.mxu0 0
      %375 = vmatpush.bf16.msra.mxu0 0
      %376 = vmatpush.bf16.msra.mxu0 %v318
      %377 = vmatpush.bf16.msra.mxu0 %v317
      %378 = vmatpush.bf16.msra.mxu0 %v316
      %379 = vmatpush.bf16.msra.mxu0 %v315
      %380 = vmatmul.bf16.gmra.mxu0 %v325
      %v381 = vpop.f32.mrf.mxu0
      %v382 = vadd.f32 %v217, %v381
      %v383 = vpop.f32.mrf.mxu0
      %v384 = vadd.f32 %v217, %v383
      %385 = vmatmul.bf16.gmra.mxu0 %v328
      %v386 = vpop.f32.mrf.mxu0
      %v387 = vadd.f32 %v217, %v386
      %v388 = vpop.f32.mrf.mxu0
      %v389 = vadd.f32 %v217, %v388
      %390 = vmatmul.bf16.gmra.mxu0 %v331
      %v391 = vpop.f32.mrf.mxu0
      %v392 = vadd.f32 %v217, %v391
      %v393 = vpop.f32.mrf.mxu0
      %v394 = vadd.f32 %v217, %v393
      %395 = vmatmul.bf16.gmra.mxu0 %v334
      %v396 = vpop.f32.mrf.mxu0
      %v397 = vadd.f32 %v217, %v396
      %v398 = vpop.f32.mrf.mxu0
      %v399 = vadd.f32 %v217, %v398
      %400 = vmatmul.bf16.gmra.mxu0 %v337
      %v401 = vpop.f32.mrf.mxu0
      %v402 = vadd.f32 %v217, %v401
      %v403 = vpop.f32.mrf.mxu0
      %v404 = vadd.f32 %v217, %v403
      %405 = vmatmul.bf16.gmra.mxu0 %v340
      %v406 = vpop.f32.mrf.mxu0
      %v407 = vadd.f32 %v217, %v406
      %v408 = vpop.f32.mrf.mxu0
      %v409 = vadd.f32 %v217, %v408
      %410 = vmatmul.bf16.gmra.mxu0 %v343
      %v411 = vpop.f32.mrf.mxu0
      %v412 = vadd.f32 %v217, %v411
      %v413 = vpop.f32.mrf.mxu0
      %v414 = vadd.f32 %v217, %v413
      %415 = vmatmul.bf16.gmra.mxu0 %v346
      %v416 = vpop.f32.mrf.mxu0
      %v417 = vadd.f32 %v217, %v416
      %v418 = vpop.f32.mrf.mxu0
      %v419 = vadd.f32 %v217, %v418
      %420 = vmatmul.bf16.gmra.mxu0 %v349
      %v421 = vpop.f32.mrf.mxu0
      %v422 = vadd.f32 %v217, %v421
      %v423 = vpop.f32.mrf.mxu0
      %v424 = vadd.f32 %v217, %v423
      %425 = vmatmul.bf16.gmra.mxu0 %v352
      %v426 = vpop.f32.mrf.mxu0
      %v427 = vadd.f32 %v217, %v426
      %v428 = vpop.f32.mrf.mxu0
      %v429 = vadd.f32 %v217, %v428
      %430 = vmatmul.bf16.gmra.mxu0 %v355
      %v431 = vpop.f32.mrf.mxu0
      %v432 = vadd.f32 %v217, %v431
      %v433 = vpop.f32.mrf.mxu0
      %v434 = vadd.f32 %v217, %v433
      %435 = vmatmul.bf16.gmra.mxu0 %v358
      %v436 = vpop.f32.mrf.mxu0
      %v437 = vadd.f32 %v217, %v436
      %v438 = vpop.f32.mrf.mxu0
      %v439 = vadd.f32 %v217, %v438
      %440 = vmatmul.bf16.gmra.mxu0 %v361
      %v441 = vpop.f32.mrf.mxu0
      %v442 = vadd.f32 %v217, %v441
      %v443 = vpop.f32.mrf.mxu0
      %v444 = vadd.f32 %v217, %v443
      %445 = vmatmul.bf16.gmra.mxu0 %v364
      %v446 = vpop.f32.mrf.mxu0
      %v447 = vadd.f32 %v217, %v446
      %v448 = vpop.f32.mrf.mxu0
      %v449 = vadd.f32 %v217, %v448
      %450 = vmatmul.bf16.gmra.mxu0 %v367
      %v451 = vpop.f32.mrf.mxu0
      %v452 = vadd.f32 %v217, %v451
      %v453 = vpop.f32.mrf.mxu0
      %v454 = vadd.f32 %v217, %v453
      %455 = vmatmul.bf16.gmra.mxu0 %v370
      %v456 = vpop.f32.mrf.mxu0
      %v457 = vadd.f32 %v217, %v456
      %v458 = vpop.f32.mrf.mxu0
      %v459 = vadd.f32 %v217, %v458
      %460 = vdwg.mxu0
      %v461 = vmax.f32 %v382, 0.0
      %v462 = vmax.f32 %v384, 0.0
      %v463 = vmax.f32 %v387, 0.0
      %v464 = vmax.f32 %v389, 0.0
      %v465 = vmax.f32 %v392, 0.0
      %v466 = vmax.f32 %v394, 0.0
      %v467 = vmax.f32 %v397, 0.0
      %v468 = vmax.f32 %v399, 0.0
      %v469 = vmax.f32 %v402, 0.0
      %v470 = vmax.f32 %v404, 0.0
      %v471 = vmax.f32 %v407, 0.0
      %v472 = vmax.f32 %v409, 0.0
      %v473 = vmax.f32 %v412, 0.0
      %v474 = vmax.f32 %v414, 0.0
      %v475 = vmax.f32 %v417, 0.0
      %v476 = vmax.f32 %v419, 0.0
      %v477 = vmax.f32 %v422, 0.0
      %v478 = vmax.f32 %v424, 0.0
      %v479 = vmax.f32 %v427, 0.0
      %v480 = vmax.f32 %v429, 0.0
      %v481 = vmax.f32 %v432, 0.0
      %v482 = vmax.f32 %v434, 0.0
      %v483 = vmax.f32 %v437, 0.0
      %v484 = vmax.f32 %v439, 0.0
      %v485 = vmax.f32 %v442, 0.0
      %v486 = vmax.f32 %v444, 0.0
      %v487 = vmax.f32 %v447, 0.0
      %v488 = vmax.f32 %v449, 0.0
      %v489 = vmax.f32 %v452, 0.0
      %v490 = vmax.f32 %v454, 0.0
      %v491 = vmax.f32 %v457, 0.0
      %v492 = vmax.f32 %v459, 0.0
      %v493 = vpack.c.bf16 %v461, %v461
      %v494 = vpack.c.bf16 %v462, %v462
      %v495 = vpack.c.bf16 %v463, %v463
      %v496 = vpack.c.bf16 %v464, %v464
      %v497 = vpack.c.bf16 %v465, %v465
      %v498 = vpack.c.bf16 %v466, %v466
      %v499 = vpack.c.bf16 %v467, %v467
      %v500 = vpack.c.bf16 %v468, %v468
      %v501 = vpack.c.bf16 %v469, %v469
      %v502 = vpack.c.bf16 %v470, %v470
      %v503 = vpack.c.bf16 %v471, %v471
      %v504 = vpack.c.bf16 %v472, %v472
      %v505 = vpack.c.bf16 %v473, %v473
      %v506 = vpack.c.bf16 %v474, %v474
      %v507 = vpack.c.bf16 %v475, %v475
      %v508 = vpack.c.bf16 %v476, %v476
      %v509 = vpack.c.bf16 %v477, %v477
      %v510 = vpack.c.bf16 %v478, %v478
      %v511 = vpack.c.bf16 %v479, %v479
      %v512 = vpack.c.bf16 %v480, %v480
      %v513 = vpack.c.bf16 %v481, %v481
      %v514 = vpack.c.bf16 %v482, %v482
      %v515 = vpack.c.bf16 %v483, %v483
      %v516 = vpack.c.bf16 %v484, %v484
      %v517 = vpack.c.bf16 %v485, %v485
      %v518 = vpack.c.bf16 %v486, %v486
      %v519 = vpack.c.bf16 %v487, %v487
      %v520 = vpack.c.bf16 %v488, %v488
      %v521 = vpack.c.bf16 %v489, %v489
      %v522 = vpack.c.bf16 %v490, %v490
      %v523 = vpack.c.bf16 %v491, %v491
      %v524 = vpack.c.bf16 %v492, %v492
      %vm525 = vcmask 257024
      %526 = vst.msk [vmem:[%s172] sm:$0xf] %vm525, %v493
      %527 = vst.msk [vmem:[%s172 + $0x4] sm:$0xf] %vm525, %v494
      %528 = vst.msk [vmem:[%s172 + $0x8] sm:$0xf] %vm525, %v495
      %529 = vst.msk [vmem:[%s172 + $0xc] sm:$0xf] %vm525, %v496
      %530 = vst.msk [vmem:[%s172 + $0x10] sm:$0xf] %vm525, %v497
      %531 = vst.msk [vmem:[%s172 + $0x14] sm:$0xf] %vm525, %v498
      %532 = vst.msk [vmem:[%s172 + $0x18] sm:$0xf] %vm525, %v499
      %533 = vst.msk [vmem:[%s172 + $0x1c] sm:$0xf] %vm525, %v500
      %534 = vst.msk [vmem:[%s172 + $0x20] sm:$0xf] %vm525, %v501
      %535 = vst.msk [vmem:[%s172 + $0x24] sm:$0xf] %vm525, %v502
      %536 = vst.msk [vmem:[%s172 + $0x28] sm:$0xf] %vm525, %v503
      %537 = vst.msk [vmem:[%s172 + $0x2c] sm:$0xf] %vm525, %v504
      %538 = vst.msk [vmem:[%s172 + $0x30] sm:$0xf] %vm525, %v505
      %539 = vst.msk [vmem:[%s172 + $0x34] sm:$0xf] %vm525, %v506
      %540 = vst.msk [vmem:[%s172 + $0x38] sm:$0xf] %vm525, %v507
      %541 = vst.msk [vmem:[%s172 + $0x3c] sm:$0xf] %vm525, %v508
      %542 = vst.msk [vmem:[%s172 + $0x40] sm:$0xf] %vm525, %v509
      %543 = vst.msk [vmem:[%s172 + $0x44] sm:$0xf] %vm525, %v510
      %544 = vst.msk [vmem:[%s172 + $0x48] sm:$0xf] %vm525, %v511
      %545 = vst.msk [vmem:[%s172 + $0x4c] sm:$0xf] %vm525, %v512
      %546 = vst.msk [vmem:[%s172 + $0x50] sm:$0xf] %vm525, %v513
      %547 = vst.msk [vmem:[%s172 + $0x54] sm:$0xf] %vm525, %v514
      %548 = vst.msk [vmem:[%s172 + $0x58] sm:$0xf] %vm525, %v515
      %549 = vst.msk [vmem:[%s172 + $0x5c] sm:$0xf] %vm525, %v516
      %550 = vst.msk [vmem:[%s172 + $0x60] sm:$0xf] %vm525, %v517
      %551 = vst.msk [vmem:[%s172 + $0x64] sm:$0xf] %vm525, %v518
      %552 = vst.msk [vmem:[%s172 + $0x68] sm:$0xf] %vm525, %v519
      %553 = vst.msk [vmem:[%s172 + $0x6c] sm:$0xf] %vm525, %v520
      %554 = vst.msk [vmem:[%s172 + $0x70] sm:$0xf] %vm525, %v521
      %555 = vst.msk [vmem:[%s172 + $0x74] sm:$0xf] %vm525, %v522
      %556 = vst.msk [vmem:[%s172 + $0x78] sm:$0xf] %vm525, %v523
      %557 = vst.msk [vmem:[%s172 + $0x7c] sm:$0xf] %vm525, %v524
      %s558 = smul.u32 32, %s14
      %p559 = scmp.lt.s32.totalorder %s558, 63
      %s560 = scalar_select %p559, %s558, 63
      %s561 = smul.addr %s560, 4
      %s562 = scalar_lea.vmem %s3, %s561
      // Predicated region
      $region33: #{forward_two_blocks.4} parent=31 // pred_check
        %p563 = pneg %p100
      $region34: #{forward_two_blocks.4} parent=31 // pred_check_branch
        %565 = sbr.rel (%p563) target = $region36
      $region35: #{forward_two_blocks.4} parent=31 // pred_region
        %s566 = smul.u32 32, %s14
      $region36: #{forward_two_blocks.4} parent=31 // pred_fallthru
        _
    $region32: #{forward_two_blocks.4} parent=5 // pred_fallthru
      _
    %p567 = scmp.le.s32.totalorder 2, %s9
    // Predicated region
    $region37: #{forward_two_blocks.4} parent=5 // pred_check
      %p568 = pneg %p567
    $region38: #{forward_two_blocks.4} parent=5 // pred_check_branch
      %570 = sbr.rel (%p568) target = $region40
    $region39: #{forward_two_blocks.4} parent=5 // pred_region
      %s571 = ssub.s32 %s9, 2
      // Predicated region
      $region41: #{forward_two_blocks.4} parent=39 // pred_check
        %p572 = pneg %p106
      $region42: #{forward_two_blocks.4} parent=39 // pred_check_branch
        %574 = sbr.rel (%p572) target = $region44
      $region43: #{forward_two_blocks.4} parent=39 // pred_region
        %s575 = smul.u32 32, %s15
        %p576 = scmp.lt.s32.totalorder %s575, 63
        %s577 = scalar_select %p576, %s575, 63
        %s578 = smul.addr %s577, 4
        %s579 = scalar_lea.vmem %s3, %s578
      $region44: #{forward_two_blocks.4} parent=39 // pred_fallthru
        _
    $region40: #{forward_two_blocks.4} parent=5 // pred_fallthru
      _
  $region6: #{forward_two_blocks.4} parent=0 // loop_footer
    %s13 = sadd.s32 1, %s9
  $region7: #{forward_two_blocks.4} parent=0 // loop_footer_branch
    %8 = sbr.rel target = $region3
  $region8: #{forward_two_blocks.4} parent=0 // loop_exit
    _

// kernel: forward_two_blocks.6
$region0: #{forward_two_blocks.6}
  #allocation0 [shape = 'u32[]', space=smem, size = 0x4, offset = 0x4, fixed_abs, tag = 'smem constant byte address 0x4 - core index']
  #allocation1 [shape = 'u32[72,128]{1,0:T(1,128)}', space=vmem, size = 0x9000, scoped, tag = 'internal scratch']
  %s0 = inlined_call_operand.vmem [shape: bf16[128,128], index: 0, kind: input, shape index: {}]
  %s1 = inlined_call_operand.vmem [shape: bf16[128,32], index: 1, kind: input, shape index: {}]
  %s2 = inlined_call_operand.vmem [shape: f32[1,32], index: 2, kind: input, shape index: {}]
  %s3 = inlined_call_operand.vmem [shape: bf16[128,32], index: 3, kind: output, shape index: {}]
  %s4 = sld [smem:[#allocation0]]
  $region22: #{forward_two_blocks.6} parent=0
    _
  %s6 = ssub.s32 1, %s4
  %s7 = scalar_select 0, %s6, %s4
  // Predicated region
  $region2: #{forward_two_blocks.6} parent=0 // pred_check
    _
  $region3: #{forward_two_blocks.6} parent=0 // pred_check_branch
    %9 = sbr.rel (0) target = $region5
  $region4: #{forward_two_blocks.6} parent=0 // pred_region
    _
  $region5: #{forward_two_blocks.6} parent=0 // pred_fallthru
    _
  // Predicated region
  $region6: #{forward_two_blocks.6} parent=0 // pred_check
    _
  $region7: #{forward_two_blocks.6} parent=0 // pred_check_branch
    %11 = sbr.rel (0) target = $region9
  $region8: #{forward_two_blocks.6} parent=0 // pred_region
    _
  $region9: #{forward_two_blocks.6} parent=0 // pred_fallthru
    _
  // Predicated region
  $region10: #{forward_two_blocks.6} parent=0 // pred_check
    _
  $region11: #{forward_two_blocks.6} parent=0 // pred_check_branch
    %13 = sbr.rel (0) target = $region13
  $region12: #{forward_two_blocks.6} parent=0 // pred_region
    _
  $region13: #{forward_two_blocks.6} parent=0 // pred_fallthru
    _
  %v14 = vld [vmem:[%s0] sm:$0xf]
  %v15 = vld [vmem:[%s0 + $0x4] sm:$0xf]
  %v16 = vld [vmem:[%s0 + $0x8] sm:$0xf]
  %v17 = vld [vmem:[%s0 + $0xc] sm:$0xf]
  %v18 = vld [vmem:[%s0 + $0x10] sm:$0xf]
  %v19 = vld [vmem:[%s0 + $0x14] sm:$0xf]
  %v20 = vld [vmem:[%s0 + $0x18] sm:$0xf]
  %v21 = vld [vmem:[%s0 + $0x1c] sm:$0xf]
  %v22 = vld [vmem:[%s0 + $0x20] sm:$0xf]
  %v23 = vld [vmem:[%s0 + $0x24] sm:$0xf]
  %v24 = vld [vmem:[%s0 + $0x28] sm:$0xf]
  %v25 = vld [vmem:[%s0 + $0x2c] sm:$0xf]
  %v26 = vld [vmem:[%s0 + $0x30] sm:$0xf]
  %v27 = vld [vmem:[%s0 + $0x34] sm:$0xf]
  %v28 = vld [vmem:[%s0 + $0x38] sm:$0xf]
  %v29 = vld [vmem:[%s0 + $0x3c] sm:$0xf]
  %v30 = vld [vmem:[%s1] sm:$0xf]
  %v31 = vld [vmem:[%s1 + $0x4] sm:$0xf]
  %v32 = vld [vmem:[%s1 + $0x8] sm:$0xf]
  %v33 = vld [vmem:[%s1 + $0xc] sm:$0xf]
  %v34 = vld [vmem:[%s1 + $0x10] sm:$0xf]
  %v35 = vld [vmem:[%s1 + $0x14] sm:$0xf]
  %v36 = vld [vmem:[%s1 + $0x18] sm:$0xf]
  %v37 = vld [vmem:[%s1 + $0x1c] sm:$0xf]
  %v38 = vld [vmem:[%s1 + $0x20] sm:$0xf]
  %v39 = vld [vmem:[%s1 + $0x24] sm:$0xf]
  %v40 = vld [vmem:[%s1 + $0x28] sm:$0xf]
  %v41 = vld [vmem:[%s1 + $0x2c] sm:$0xf]
  %v42 = vld [vmem:[%s1 + $0x30] sm:$0xf]
  %v43 = vld [vmem:[%s1 + $0x34] sm:$0xf]
  %v44 = vld [vmem:[%s1 + $0x38] sm:$0xf]
  %v45 = vld [vmem:[%s1 + $0x3c] sm:$0xf]
  %v46 = vld [vmem:[%s2] sm:$0x1]
  %v48 = vperm.slane %v46, 0
  %v66 = vunpack.c.l.b16 %v14
  %v67 = vunpack.c.l.b16 %v15
  %v68 = vunpack.c.l.b16 %v16
  %v69 = vunpack.c.l.b16 %v17
  %v70 = vunpack.c.l.b16 %v18
  %v71 = vunpack.c.l.b16 %v19
  %v72 = vunpack.c.l.b16 %v20
  %v73 = vunpack.c.l.b16 %v21
  %v74 = vunpack.c.l.b16 %v22
  %v75 = vunpack.c.l.b16 %v23
  %v76 = vunpack.c.l.b16 %v24
  %v77 = vunpack.c.l.b16 %v25
  %v78 = vunpack.c.l.b16 %v26
  %v79 = vunpack.c.l.b16 %v27
  %v80 = vunpack.c.l.b16 %v28
  %v81 = vunpack.c.l.b16 %v29
  %v82 = vpack.c.b16 %v67, %v66
  %v83 = vpack.c.b16 %v69, %v68
  %v84 = vpack.c.b16 %v71, %v70
  %v85 = vpack.c.b16 %v73, %v72
  %v86 = vpack.c.b16 %v75, %v74
  %v87 = vpack.c.b16 %v77, %v76
  %v88 = vpack.c.b16 %v79, %v78
  %v89 = vpack.c.b16 %v81, %v80
  %v114 = vunpack.c.l.b16 %v30
  %v115 = vunpack.c.l.b16 %v31
  %v116 = vunpack.c.l.b16 %v32
  %v117 = vunpack.c.l.b16 %v33
  %v118 = vunpack.c.l.b16 %v34
  %v119 = vunpack.c.l.b16 %v35
  %v120 = vunpack.c.l.b16 %v36
  %v121 = vunpack.c.l.b16 %v37
  %v122 = vunpack.c.l.b16 %v38
  %v123 = vunpack.c.l.b16 %v39
  %v124 = vunpack.c.l.b16 %v40
  %v125 = vunpack.c.l.b16 %v41
  %v126 = vunpack.c.l.b16 %v42
  %v127 = vunpack.c.l.b16 %v43
  %v128 = vunpack.c.l.b16 %v44
  %v129 = vunpack.c.l.b16 %v45
  %v130 = vpack.c.b16 %v115, %v114
  %v131 = vpack.c.b16 %v117, %v116
  %v132 = vpack.c.b16 %v119, %v118
  %v133 = vpack.c.b16 %v121, %v120
  %v134 = vpack.c.b16 %v123, %v122
  %v135 = vpack.c.b16 %v125, %v124
  %v136 = vpack.c.b16 %v127, %v126
  %v137 = vpack.c.b16 %v129, %v128
  %146 = vmatpush.bf16.msra.mxu0 %v137
  %147 = vmatpush.bf16.msra.mxu0 %v136
  %148 = vmatpush.bf16.msra.mxu0 %v135
  %149 = vmatpush.bf16.msra.mxu0 %v134
  %150 = vmatpush.bf16.msra.mxu0 %v133
  %151 = vmatpush.bf16.msra.mxu0 %v132
  %152 = vmatpush.bf16.msra.mxu0 %v131
  %153 = vmatpush.bf16.msra.mxu0 %v130
  %154 = vmatmul.bf16.gmra.mxu0 %v82
  %v155 = vpop.f32.mrf.mxu0
  %v156 = vadd.f32 %v48, %v155
  %v157 = vpop.f32.mrf.mxu0
  %v158 = vadd.f32 %v48, %v157
  %159 = vmatmul.bf16.gmra.mxu0 %v83
  %v160 = vpop.f32.mrf.mxu0
  %v161 = vadd.f32 %v48, %v160
  %v162 = vpop.f32.mrf.mxu0
  %v163 = vadd.f32 %v48, %v162
  %164 = vmatmul.bf16.gmra.mxu0 %v84
  %v165 = vpop.f32.mrf.mxu0
  %v166 = vadd.f32 %v48, %v165
  %v167 = vpop.f32.mrf.mxu0
  %v168 = vadd.f32 %v48, %v167
  %169 = vmatmul.bf16.gmra.mxu0 %v85
  %v170 = vpop.f32.mrf.mxu0
  %v171 = vadd.f32 %v48, %v170
  %v172 = vpop.f32.mrf.mxu0
  %v173 = vadd.f32 %v48, %v172
  %174 = vmatmul.bf16.gmra.mxu0 %v86
  %v175 = vpop.f32.mrf.mxu0
  %v176 = vadd.f32 %v48, %v175
  %v177 = vpop.f32.mrf.mxu0
  %v178 = vadd.f32 %v48, %v177
  %179 = vmatmul.bf16.gmra.mxu0 %v87
  %v180 = vpop.f32.mrf.mxu0
  %v181 = vadd.f32 %v48, %v180
  %v182 = vpop.f32.mrf.mxu0
  %v183 = vadd.f32 %v48, %v182
  %184 = vmatmul.bf16.gmra.mxu0 %v88
  %v185 = vpop.f32.mrf.mxu0
  %v186 = vadd.f32 %v48, %v185
  %v187 = vpop.f32.mrf.mxu0
  %v188 = vadd.f32 %v48, %v187
  %189 = vmatmul.bf16.gmra.mxu0 %v89
  %v190 = vpop.f32.mrf.mxu0
  %v191 = vadd.f32 %v48, %v190
  %v192 = vpop.f32.mrf.mxu0
  %v193 = vadd.f32 %v48, %v192
  %194 = vdwg.mxu0
  %v195 = vmax.f32 %v156, 0.0
  %v196 = vmax.f32 %v158, 0.0
  %v197 = vmax.f32 %v161, 0.0
  %v198 = vmax.f32 %v163, 0.0
  %v199 = vmax.f32 %v166, 0.0
  %v200 = vmax.f32 %v168, 0.0
  %v201 = vmax.f32 %v171, 0.0
  %v202 = vmax.f32 %v173, 0.0
  %v203 = vmax.f32 %v176, 0.0
  %v204 = vmax.f32 %v178, 0.0
  %v205 = vmax.f32 %v181, 0.0
  %v206 = vmax.f32 %v183, 0.0
  %v207 = vmax.f32 %v186, 0.0
  %v208 = vmax.f32 %v188, 0.0
  %v209 = vmax.f32 %v191, 0.0
  %v210 = vmax.f32 %v193, 0.0
  %v211 = vpack.c.bf16 %v195, %v195
  %v212 = vpack.c.bf16 %v196, %v196
  %v213 = vpack.c.bf16 %v197, %v197
  %v214 = vpack.c.bf16 %v198, %v198
  %v215 = vpack.c.bf16 %v199, %v199
  %v216 = vpack.c.bf16 %v200, %v200
  %v217 = vpack.c.bf16 %v201, %v201
  %v218 = vpack.c.bf16 %v202, %v202
  %v219 = vpack.c.bf16 %v203, %v203
  %v220 = vpack.c.bf16 %v204, %v204
  %v221 = vpack.c.bf16 %v205, %v205
  %v222 = vpack.c.bf16 %v206, %v206
  %v223 = vpack.c.bf16 %v207, %v207
  %v224 = vpack.c.bf16 %v208, %v208
  %v225 = vpack.c.bf16 %v209, %v209
  %v226 = vpack.c.bf16 %v210, %v210
  %vm227 = vcmask 257024
  %228 = vst.msk [vmem:[%s3] sm:$0xf] %vm227, %v211
  %229 = vst.msk [vmem:[%s3 + $0x4] sm:$0xf] %vm227, %v212
  %230 = vst.msk [vmem:[%s3 + $0x8] sm:$0xf] %vm227, %v213
  %231 = vst.msk [vmem:[%s3 + $0xc] sm:$0xf] %vm227, %v214
  %232 = vst.msk [vmem:[%s3 + $0x10] sm:$0xf] %vm227, %v215
  %233 = vst.msk [vmem:[%s3 + $0x14] sm:$0xf] %vm227, %v216
  %234 = vst.msk [vmem:[%s3 + $0x18] sm:$0xf] %vm227, %v217
  %235 = vst.msk [vmem:[%s3 + $0x1c] sm:$0xf] %vm227, %v218
  %236 = vst.msk [vmem:[%s3 + $0x20] sm:$0xf] %vm227, %v219
  %237 = vst.msk [vmem:[%s3 + $0x24] sm:$0xf] %vm227, %v220
  %238 = vst.msk [vmem:[%s3 + $0x28] sm:$0xf] %vm227, %v221
  %239 = vst.msk [vmem:[%s3 + $0x2c] sm:$0xf] %vm227, %v222
  %240 = vst.msk [vmem:[%s3 + $0x30] sm:$0xf] %vm227, %v223
  %241 = vst.msk [vmem:[%s3 + $0x34] sm:$0xf] %vm227, %v224
  %242 = vst.msk [vmem:[%s3 + $0x38] sm:$0xf] %vm227, %v225
  %243 = vst.msk [vmem:[%s3 + $0x3c] sm:$0xf] %vm227, %v226
  // Predicated region
  $region14: #{forward_two_blocks.6} parent=0 // pred_check
    _
  $region15: #{forward_two_blocks.6} parent=0 // pred_check_branch
    %245 = sbr.rel (0) target = $region17
  $region16: #{forward_two_blocks.6} parent=0 // pred_region
    _
  $region17: #{forward_two_blocks.6} parent=0 // pred_fallthru
    _
  // Predicated region
  $region18: #{forward_two_blocks.6} parent=0 // pred_check
    _
  $region19: #{forward_two_blocks.6} parent=0 // pred_check_branch
    %247 = sbr.rel (0) target = $region21
  $region20: #{forward_two_blocks.6} parent=0 // pred_region
    _
  $region21: #{forward_two_blocks.6} parent=0 // pred_fallthru
    _

// kernel: forward_two_blocks.5
$region0: #{forward_two_blocks.5}
  #allocation0 [shape = 'u32[]', space=smem, size = 0x4, offset = 0x4, fixed_abs, tag = 'smem constant byte address 0x4 - core index']
  #allocation1 [shape = 'u32[72,128]{1,0:T(1,128)}', space=vmem, size = 0x9000, scoped, tag = 'internal scratch']
  %s0 = inlined_call_operand.vmem [shape: bf16[128,288], index: 0, kind: input, shape index: {}]
  %s1 = inlined_call_operand.vmem [shape: bf16[288,32], index: 1, kind: input, shape index: {}]
  %s2 = inlined_call_operand.vmem [shape: f32[1,32], index: 2, kind: input, shape index: {}]
  %s3 = inlined_call_operand.vmem [shape: bf16[32,128], index: 3, kind: input, shape index: {}]
  %s4 = inlined_call_operand.vmem [shape: f32[1,128], index: 4, kind: input, shape index: {}]
  %s5 = inlined_call_operand.vmem [shape: bf16[128,64], index: 5, kind: input, shape index: {}]
  %s6 = inlined_call_operand.vmem [shape: bf16[64,128], index: 6, kind: input, shape index: {}]
  %s7 = inlined_call_operand.vmem [shape: f32[1,128], index: 7, kind: input, shape index: {}]
  %s8 = inlined_call_operand.vmem [shape: bf16[128,128], index: 8, kind: output, shape index: {}]
  %s9 = sld [smem:[#allocation0]]
  $region42: #{forward_two_blocks.5} parent=0
    _
  %s11 = ssub.s32 1, %s9
  %s12 = scalar_select 0, %s11, %s9
  // Predicated region
  $region2: #{forward_two_blocks.5} parent=0 // pred_check
    _
  $region3: #{forward_two_blocks.5} parent=0 // pred_check_branch
    %14 = sbr.rel (0) target = $region5
  $region4: #{forward_two_blocks.5} parent=0 // pred_region
    _
  $region5: #{forward_two_blocks.5} parent=0 // pred_fallthru
    _
  // Predicated region
  $region6: #{forward_two_blocks.5} parent=0 // pred_check
    _
  $region7: #{forward_two_blocks.5} parent=0 // pred_check_branch
    %16 = sbr.rel (0) target = $region9
  $region8: #{forward_two_blocks.5} parent=0 // pred_region
    _
  $region9: #{forward_two_blocks.5} parent=0 // pred_fallthru
    _
  // Predicated region
  $region10: #{forward_two_blocks.5} parent=0 // pred_check
    _
  $region11: #{forward_two_blocks.5} parent=0 // pred_check_branch
    %18 = sbr.rel (0) target = $region13
  $region12: #{forward_two_blocks.5} parent=0 // pred_region
    _
  $region13: #{forward_two_blocks.5} parent=0 // pred_fallthru
    _
  // Predicated region
  $region14: #{forward_two_blocks.5} parent=0 // pred_check
    _
  $region15: #{forward_two_blocks.5} parent=0 // pred_check_branch
    %20 = sbr.rel (0) target = $region17
  $region16: #{forward_two_blocks.5} parent=0 // pred_region
    _
  $region17: #{forward_two_blocks.5} parent=0 // pred_fallthru
    _
  // Predicated region
  $region18: #{forward_two_blocks.5} parent=0 // pred_check
    _
  $region19: #{forward_two_blocks.5} parent=0 // pred_check_branch
    %22 = sbr.rel (0) target = $region21
  $region20: #{forward_two_blocks.5} parent=0 // pred_region
    _
  $region21: #{forward_two_blocks.5} parent=0 // pred_fallthru
    _
  // Predicated region
  $region22: #{forward_two_blocks.5} parent=0 // pred_check
    _
  $region23: #{forward_two_blocks.5} parent=0 // pred_check_branch
    %24 = sbr.rel (0) target = $region25
  $region24: #{forward_two_blocks.5} parent=0 // pred_region
    _
  $region25: #{forward_two_blocks.5} parent=0 // pred_fallthru
    _
  // Predicated region
  $region26: #{forward_two_blocks.5} parent=0 // pred_check
    _
  $region27: #{forward_two_blocks.5} parent=0 // pred_check_branch
    %26 = sbr.rel (0) target = $region29
  $region28: #{forward_two_blocks.5} parent=0 // pred_region
    _
  $region29: #{forward_two_blocks.5} parent=0 // pred_fallthru
    _
  // Predicated region
  $region30: #{forward_two_blocks.5} parent=0 // pred_check
    _
  $region31: #{forward_two_blocks.5} parent=0 // pred_check_branch
    %28 = sbr.rel (0) target = $region33
  $region32: #{forward_two_blocks.5} parent=0 // pred_region
    _
  $region33: #{forward_two_blocks.5} parent=0 // pred_fallthru
    _
  %v30 = vld [vmem:[%s0] sm:$0xff]
  %v31 = vld [vmem:[%s0 + $0x8] sm:$0xf]
  %v32 = vld [vmem:[%s0 + $0xc] sm:$0xff]
  %v33 = vld [vmem:[%s0 + $0x14] sm:$0xf]
  %v34 = vld [vmem:[%s0 + $0x18] sm:$0xff]
  %v35 = vld [vmem:[%s0 + $0x20] sm:$0xf]
  %v36 = vld [vmem:[%s0 + $0x24] sm:$0xff]
  %v37 = vld [vmem:[%s0 + $0x2c] sm:$0xf]
  %v38 = vld [vmem:[%s0 + $0x30] sm:$0xff]
  %v39 = vld [vmem:[%s0 + $0x38] sm:$0xf]
  %v40 = vld [vmem:[%s0 + $0x3c] sm:$0xff]
  %v41 = vld [vmem:[%s0 + $0x44] sm:$0xf]
  %v42 = vld [vmem:[%s0 + $0x48] sm:$0xff]
  %v43 = vld [vmem:[%s0 + $0x50] sm:$0xf]
  %v44 = vld [vmem:[%s0 + $0x54] sm:$0xff]
  %v45 = vld [vmem:[%s0 + $0x5c] sm:$0xf]
  %v46 = vld [vmem:[%s0 + $0x60] sm:$0xff]
  %v47 = vld [vmem:[%s0 + $0x68] sm:$0xf]
  %v48 = vld [vmem:[%s0 + $0x6c] sm:$0xff]
  %v49 = vld [vmem:[%s0 + $0x74] sm:$0xf]
  %v50 = vld [vmem:[%s0 + $0x78] sm:$0xff]
  %v51 = vld [vmem:[%s0 + $0x80] sm:$0xf]
  %v52 = vld [vmem:[%s0 + $0x84] sm:$0xff]
  %v53 = vld [vmem:[%s0 + $0x8c] sm:$0xf]
  %v54 = vld [vmem:[%s0 + $0x90] sm:$0xff]
  %v55 = vld [vmem:[%s0 + $0x98] sm:$0xf]
  %v56 = vld [vmem:[%s0 + $0x9c] sm:$0xff]
  %v57 = vld [vmem:[%s0 + $0xa4] sm:$0xf]
  %v58 = vld [vmem:[%s0 + $0xa8] sm:$0xff]
  %v59 = vld [vmem:[%s0 + $0xb0] sm:$0xf]
  %v60 = vld [vmem:[%s0 + $0xb4] sm:$0xff]
  %v61 = vld [vmem:[%s0 + $0xbc] sm:$0xf]
  %v62 = vld [vmem:[%s1] sm:$0xf]
  %v63 = vld [vmem:[%s1 + $0x4] sm:$0xf]
  %v64 = vld [vmem:[%s1 + $0x8] sm:$0xf]
  %v65 = vld [vmem:[%s1 + $0xc] sm:$0xf]
  %v66 = vld [vmem:[%s1 + $0x10] sm:$0xf]
  %v67 = vld [vmem:[%s1 + $0x14] sm:$0xf]
  %v68 = vld [vmem:[%s1 + $0x18] sm:$0xf]
  %v69 = vld [vmem:[%s1 + $0x1c] sm:$0xf]
  %v70 = vld [vmem:[%s1 + $0x20] sm:$0xf]
  %v71 = vld [vmem:[%s1 + $0x24] sm:$0xf]
  %v72 = vld [vmem:[%s1 + $0x28] sm:$0xf]
  %v73 = vld [vmem:[%s1 + $0x2c] sm:$0xf]
  %v74 = vld [vmem:[%s1 + $0x30] sm:$0xf]
  %v75 = vld [vmem:[%s1 + $0x34] sm:$0xf]
  %v76 = vld [vmem:[%s1 + $0x38] sm:$0xf]
  %v77 = vld [vmem:[%s1 + $0x3c] sm:$0xf]
  %v78 = vld [vmem:[%s1 + $0x40] sm:$0xf]
  %v79 = vld [vmem:[%s1 + $0x44] sm:$0xf]
  %v80 = vld [vmem:[%s1 + $0x48] sm:$0xf]
  %v81 = vld [vmem:[%s1 + $0x4c] sm:$0xf]
  %v82 = vld [vmem:[%s1 + $0x50] sm:$0xf]
  %v83 = vld [vmem:[%s1 + $0x54] sm:$0xf]
  %v84 = vld [vmem:[%s1 + $0x58] sm:$0xf]
  %v85 = vld [vmem:[%s1 + $0x5c] sm:$0xf]
  %v86 = vld [vmem:[%s1 + $0x60] sm:$0xf]
  %v87 = vld [vmem:[%s1 + $0x64] sm:$0xf]
  %v88 = vld [vmem:[%s1 + $0x68] sm:$0xf]
  %v89 = vld [vmem:[%s1 + $0x6c] sm:$0xf]
  %v90 = vld [vmem:[%s1 + $0x70] sm:$0xf]
  %v91 = vld [vmem:[%s1 + $0x74] sm:$0xf]
  %v92 = vld [vmem:[%s1 + $0x78] sm:$0xf]
  %v93 = vld [vmem:[%s1 + $0x7c] sm:$0xf]
  %v94 = vld [vmem:[%s1 + $0x80] sm:$0xf]
  %v95 = vld [vmem:[%s1 + $0x84] sm:$0xf]
  %v96 = vld [vmem:[%s1 + $0x88] sm:$0xf]
  %v97 = vld [vmem:[%s1 + $0x8c] sm:$0xf]
  %v98 = vld [vmem:[%s2] sm:$0x1]
  %v100 = vperm.slane %v98, 0
  %v134 = vunpack.c.l.b16 %v30
  %v135 = vunpack.c.h.b16 %v30
  %v136 = vunpack.c.l.b16 %v31
  %v137 = vunpack.c.l.b16 %v32
  %v138 = vunpack.c.h.b16 %v32
  %v139 = vunpack.c.l.b16 %v33
  %v140 = vunpack.c.l.b16 %v34
  %v141 = vunpack.c.h.b16 %v34
  %v142 = vunpack.c.l.b16 %v35
  %v143 = vunpack.c.l.b16 %v36
  %v144 = vunpack.c.h.b16 %v36
  %v145 = vunpack.c.l.b16 %v37
  %v146 = vunpack.c.l.b16 %v38
  %v147 = vunpack.c.h.b16 %v38
  %v148 = vunpack.c.l.b16 %v39
  %v149 = vunpack.c.l.b16 %v40
  %v150 = vunpack.c.h.b16 %v40
  %v151 = vunpack.c.l.b16 %v41
  %v152 = vunpack.c.l.b16 %v42
  %v153 = vunpack.c.h.b16 %v42
  %v154 = vunpack.c.l.b16 %v43
  %v155 = vunpack.c.l.b16 %v44
  %v156 = vunpack.c.h.b16 %v44
  %v157 = vunpack.c.l.b16 %v45
  %v158 = vunpack.c.l.b16 %v46
  %v159 = vunpack.c.h.b16 %v46
  %v160 = vunpack.c.l.b16 %v47
  %v161 = vunpack.c.l.b16 %v48
  %v162 = vunpack.c.h.b16 %v48
  %v163 = vunpack.c.l.b16 %v49
  %v164 = vunpack.c.l.b16 %v50
  %v165 = vunpack.c.h.b16 %v50
  %v166 = vunpack.c.l.b16 %v51
  %v167 = vunpack.c.l.b16 %v52
  %v168 = vunpack.c.h.b16 %v52
  %v169 = vunpack.c.l.b16 %v53
  %v170 = vunpack.c.l.b16 %v54
  %v171 = vunpack.c.h.b16 %v54
  %v172 = vunpack.c.l.b16 %v55
  %v173 = vunpack.c.l.b16 %v56
  %v174 = vunpack.c.h.b16 %v56
  %v175 = vunpack.c.l.b16 %v57
  %v176 = vunpack.c.l.b16 %v58
  %v177 = vunpack.c.h.b16 %v58
  %v178 = vunpack.c.l.b16 %v59
  %v179 = vunpack.c.l.b16 %v60
  %v180 = vunpack.c.h.b16 %v60
  %v181 = vunpack.c.l.b16 %v61
  %v182 = vpack.c.b16 %v137, %v134
  %v183 = vpack.c.b16 %v138, %v135
  %v184 = vpack.c.b16 %v139, %v136
  %v185 = vpack.c.b16 %v143, %v140
  %v186 = vpack.c.b16 %v144, %v141
  %v187 = vpack.c.b16 %v145, %v142
  %v188 = vpack.c.b16 %v149, %v146
  %v189 = vpack.c.b16 %v150, %v147
  %v190 = vpack.c.b16 %v151, %v148
  %v191 = vpack.c.b16 %v155, %v152
  %v192 = vpack.c.b16 %v156, %v153
  %v193 = vpack.c.b16 %v157, %v154
  %v194 = vpack.c.b16 %v161, %v158
  %v195 = vpack.c.b16 %v162, %v159
  %v196 = vpack.c.b16 %v163, %v160
  %v197 = vpack.c.b16 %v167, %v164
  %v198 = vpack.c.b16 %v168, %v165
  %v199 = vpack.c.b16 %v169, %v166
  %v200 = vpack.c.b16 %v173, %v170
  %v201 = vpack.c.b16 %v174, %v171
  %v202 = vpack.c.b16 %v175, %v172
  %v203 = vpack.c.b16 %v179, %v176
  %v204 = vpack.c.b16 %v180, %v177
  %v205 = vpack.c.b16 %v181, %v178
  %v258 = vunpack.c.l.b16 %v62
  %v259 = vunpack.c.l.b16 %v63
  %v260 = vunpack.c.l.b16 %v64
  %v261 = vunpack.c.l.b16 %v65
  %v262 = vunpack.c.l.b16 %v66
  %v263 = vunpack.c.l.b16 %v67
  %v264 = vunpack.c.l.b16 %v68
  %v265 = vunpack.c.l.b16 %v69
  %v266 = vunpack.c.l.b16 %v70
  %v267 = vunpack.c.l.b16 %v71
  %v268 = vunpack.c.l.b16 %v72
  %v269 = vunpack.c.l.b16 %v73
  %v270 = vunpack.c.l.b16 %v74
  %v271 = vunpack.c.l.b16 %v75
  %v272 = vunpack.c.l.b16 %v76
  %v273 = vunpack.c.l.b16 %v77
  %v274 = vunpack.c.l.b16 %v78
  %v275 = vunpack.c.l.b16 %v79
  %v276 = vunpack.c.l.b16 %v80
  %v277 = vunpack.c.l.b16 %v81
  %v278 = vunpack.c.l.b16 %v82
  %v279 = vunpack.c.l.b16 %v83
  %v280 = vunpack.c.l.b16 %v84
  %v281 = vunpack.c.l.b16 %v85
  %v282 = vunpack.c.l.b16 %v86
  %v283 = vunpack.c.l.b16 %v87
  %v284 = vunpack.c.l.b16 %v88
  %v285 = vunpack.c.l.b16 %v89
  %v286 = vunpack.c.l.b16 %v90
  %v287 = vunpack.c.l.b16 %v91
  %v288 = vunpack.c.l.b16 %v92
  %v289 = vunpack.c.l.b16 %v93
  %v290 = vunpack.c.l.b16 %v94
  %v291 = vunpack.c.l.b16 %v95
  %v292 = vunpack.c.l.b16 %v96
  %v293 = vunpack.c.l.b16 %v97
  %v294 = vpack.c.b16 %v259, %v258
  %v295 = vpack.c.b16 %v261, %v260
  %v296 = vpack.c.b16 %v263, %v262
  %v297 = vpack.c.b16 %v265, %v264
  %v298 = vpack.c.b16 %v267, %v266
  %v299 = vpack.c.b16 %v269, %v268
  %v300 = vpack.c.b16 %v271, %v270
  %v301 = vpack.c.b16 %v273, %v272
  %v302 = vpack.c.b16 %v275, %v274
  %v303 = vpack.c.b16 %v277, %v276
  %v304 = vpack.c.b16 %v279, %v278
  %v305 = vpack.c.b16 %v281, %v280
  %v306 = vpack.c.b16 %v283, %v282
  %v307 = vpack.c.b16 %v285, %v284
  %v308 = vpack.c.b16 %v287, %v286
  %v309 = vpack.c.b16 %v289, %v288
  %v310 = vpack.c.b16 %v291, %v290
  %v311 = vpack.c.b16 %v293, %v292
  %vm330 = vcmask 261120
  %v332 = vsel %vm330, %v184, 0
  %v335 = vsel %vm330, %v187, 0
  %v338 = vsel %vm330, %v190, 0
  %v341 = vsel %vm330, %v193, 0
  %v344 = vsel %vm330, %v196, 0
  %v347 = vsel %vm330, %v199, 0
  %v350 = vsel %vm330, %v202, 0
  %v353 = vsel %vm330, %v205, 0
  %355 = vmatpush.bf16.msra.mxu0 %v301
  %356 = vmatpush.bf16.msra.mxu0 %v300
  %357 = vmatpush.bf16.msra.mxu0 %v299
  %358 = vmatpush.bf16.msra.mxu0 %v298
  %359 = vmatpush.bf16.msra.mxu0 %v297
  %360 = vmatpush.bf16.msra.mxu0 %v296
  %361 = vmatpush.bf16.msra.mxu0 %v295
  %362 = vmatpush.bf16.msra.mxu0 %v294
  %363 = vmatmul.bf16.gmra.mxu0 %v182
  %v364 = vpop.f32.mrf.mxu0
  %v365 = vadd.f32 %v100, %v364
  %v366 = vpop.f32.mrf.mxu0
  %v367 = vadd.f32 %v100, %v366
  %368 = vmatmul.bf16.gmra.mxu0 %v185
  %v369 = vpop.f32.mrf.mxu0
  %v370 = vadd.f32 %v100, %v369
  %v371 = vpop.f32.mrf.mxu0
  %v372 = vadd.f32 %v100, %v371
  %373 = vmatmul.bf16.gmra.mxu0 %v188
  %v374 = vpop.f32.mrf.mxu0
  %v375 = vadd.f32 %v100, %v374
  %v376 = vpop.f32.mrf.mxu0
  %v377 = vadd.f32 %v100, %v376
  %378 = vmatmul.bf16.gmra.mxu0 %v191
  %v379 = vpop.f32.mrf.mxu0
  %v380 = vadd.f32 %v100, %v379
  %v381 = vpop.f32.mrf.mxu0
  %v382 = vadd.f32 %v100, %v381
  %383 = vmatmul.bf16.gmra.mxu0 %v194
  %v384 = vpop.f32.mrf.mxu0
  %v385 = vadd.f32 %v100, %v384
  %v386 = vpop.f32.mrf.mxu0
  %v387 = vadd.f32 %v100, %v386
  %388 = vmatmul.bf16.gmra.mxu0 %v197
  %v389 = vpop.f32.mrf.mxu0
  %v390 = vadd.f32 %v100, %v389
  %v391 = vpop.f32.mrf.mxu0
  %v392 = vadd.f32 %v100, %v391
  %393 = vmatmul.bf16.gmra.mxu0 %v200
  %v394 = vpop.f32.mrf.mxu0
  %v395 = vadd.f32 %v100, %v394
  %v396 = vpop.f32.mrf.mxu0
  %v397 = vadd.f32 %v100, %v396
  %398 = vmatmul.bf16.gmra.mxu0 %v203
  %v399 = vpop.f32.mrf.mxu0
  %v400 = vadd.f32 %v100, %v399
  %v401 = vpop.f32.mrf.mxu0
  %v402 = vadd.f32 %v100, %v401
  %403 = vdwg.mxu0
  %404 = vmatpush.bf16.msra.mxu0 %v309
  %405 = vmatpush.bf16.msra.mxu0 %v308
  %406 = vmatpush.bf16.msra.mxu0 %v307
  %407 = vmatpush.bf16.msra.mxu0 %v306
  %408 = vmatpush.bf16.msra.mxu0 %v305
  %409 = vmatpush.bf16.msra.mxu0 %v304
  %410 = vmatpush.bf16.msra.mxu0 %v303
  %411 = vmatpush.bf16.msra.mxu0 %v302
  %412 = vmatmul.bf16.gmra.mxu0 %v183
  %v413 = vpop.f32.mrf.mxu0
  %v414 = vadd.f32 %v365, %v413
  %v415 = vpop.f32.mrf.mxu0
  %v416 = vadd.f32 %v367, %v415
  %417 = vmatmul.bf16.gmra.mxu0 %v186
  %v418 = vpop.f32.mrf.mxu0
  %v419 = vadd.f32 %v370, %v418
  %v420 = vpop.f32.mrf.mxu0
  %v421 = vadd.f32 %v372, %v420
  %422 = vmatmul.bf16.gmra.mxu0 %v189
  %v423 = vpop.f32.mrf.mxu0
  %v424 = vadd.f32 %v375, %v423
  %v425 = vpop.f32.mrf.mxu0
  %v426 = vadd.f32 %v377, %v425
  %427 = vmatmul.bf16.gmra.mxu0 %v192
  %v428 = vpop.f32.mrf.mxu0
  %v429 = vadd.f32 %v380, %v428
  %v430 = vpop.f32.mrf.mxu0
  %v431 = vadd.f32 %v382, %v430
  %432 = vmatmul.bf16.gmra.mxu0 %v195
  %v433 = vpop.f32.mrf.mxu0
  %v434 = vadd.f32 %v385, %v433
  %v435 = vpop.f32.mrf.mxu0
  %v436 = vadd.f32 %v387, %v435
  %437 = vmatmul.bf16.gmra.mxu0 %v198
  %v438 = vpop.f32.mrf.mxu0
  %v439 = vadd.f32 %v390, %v438
  %v440 = vpop.f32.mrf.mxu0
  %v441 = vadd.f32 %v392, %v440
  %442 = vmatmul.bf16.gmra.mxu0 %v201
  %v443 = vpop.f32.mrf.mxu0
  %v444 = vadd.f32 %v395, %v443
  %v445 = vpop.f32.mrf.mxu0
  %v446 = vadd.f32 %v397, %v445
  %447 = vmatmul.bf16.gmra.mxu0 %v204
  %v448 = vpop.f32.mrf.mxu0
  %v449 = vadd.f32 %v400, %v448
  %v450 = vpop.f32.mrf.mxu0
  %v451 = vadd.f32 %v402, %v450
  %452 = vdwg.mxu0
  %453 = vmatpush.bf16.msra.mxu0 0
  %454 = vmatpush.bf16.msra.mxu0 0
  %455 = vmatpush.bf16.msra.mxu0 0
  %456 = vmatpush.bf16.msra.mxu0 0
  %457 = vmatpush.bf16.msra.mxu0 0
  %458 = vmatpush.bf16.msra.mxu0 0
  %459 = vmatpush.bf16.msra.mxu0 %v311
  %460 = vmatpush.bf16.msra.mxu0 %v310
  %461 = vmatmul.bf16.gmra.mxu0 %v332
  %v462 = vpop.f32.mrf.mxu0
  %v463 = vadd.f32 %v414, %v462
  %v464 = vpop.f32.mrf.mxu0
  %v465 = vadd.f32 %v416, %v464
  %466 = vmatmul.bf16.gmra.mxu0 %v335
  %v467 = vpop.f32.mrf.mxu0
  %v468 = vadd.f32 %v419, %v467
  %v469 = vpop.f32.mrf.mxu0
  %v470 = vadd.f32 %v421, %v469
  %471 = vmatmul.bf16.gmra.mxu0 %v338
  %v472 = vpop.f32.mrf.mxu0
  %v473 = vadd.f32 %v424, %v472
  %v474 = vpop.f32.mrf.mxu0
  %v475 = vadd.f32 %v426, %v474
  %476 = vmatmul.bf16.gmra.mxu0 %v341
  %v477 = vpop.f32.mrf.mxu0
  %v478 = vadd.f32 %v429, %v477
  %v479 = vpop.f32.mrf.mxu0
  %v480 = vadd.f32 %v431, %v479
  %481 = vmatmul.bf16.gmra.mxu0 %v344
  %v482 = vpop.f32.mrf.mxu0
  %v483 = vadd.f32 %v434, %v482
  %v484 = vpop.f32.mrf.mxu0
  %v485 = vadd.f32 %v436, %v484
  %486 = vmatmul.bf16.gmra.mxu0 %v347
  %v487 = vpop.f32.mrf.mxu0
  %v488 = vadd.f32 %v439, %v487
  %v489 = vpop.f32.mrf.mxu0
  %v490 = vadd.f32 %v441, %v489
  %491 = vmatmul.bf16.gmra.mxu0 %v350
  %v492 = vpop.f32.mrf.mxu0
  %v493 = vadd.f32 %v444, %v492
  %v494 = vpop.f32.mrf.mxu0
  %v495 = vadd.f32 %v446, %v494
  %496 = vmatmul.bf16.gmra.mxu0 %v353
  %v497 = vpop.f32.mrf.mxu0
  %v498 = vadd.f32 %v449, %v497
  %v499 = vpop.f32.mrf.mxu0
  %v500 = vadd.f32 %v451, %v499
  %501 = vdwg.mxu0
  %v502 = vmax.f32 %v463, 0.0
  %v503 = vmax.f32 %v465, 0.0
  %v504 = vmax.f32 %v468, 0.0
  %v505 = vmax.f32 %v470, 0.0
  %v506 = vmax.f32 %v473, 0.0
  %v507 = vmax.f32 %v475, 0.0
  %v508 = vmax.f32 %v478, 0.0
  %v509 = vmax.f32 %v480, 0.0
  %v510 = vmax.f32 %v483, 0.0
  %v511 = vmax.f32 %v485, 0.0
  %v512 = vmax.f32 %v488, 0.0
  %v513 = vmax.f32 %v490, 0.0
  %v514 = vmax.f32 %v493, 0.0
  %v515 = vmax.f32 %v495, 0.0
  %v516 = vmax.f32 %v498, 0.0
  %v517 = vmax.f32 %v500, 0.0
  %v518 = vpack.c.bf16 %v503, %v502
  %v519 = vpack.c.bf16 %v505, %v504
  %v520 = vpack.c.bf16 %v507, %v506
  %v521 = vpack.c.bf16 %v509, %v508
  %v522 = vpack.c.bf16 %v511, %v510
  %v523 = vpack.c.bf16 %v513, %v512
  %v524 = vpack.c.bf16 %v515, %v514
  %v525 = vpack.c.bf16 %v517, %v516
  %v526 = vld [vmem:[%s3] sm:$0xf]
  %v527 = vld [vmem:[%s3 + $0x4] sm:$0xf]
  %v528 = vld [vmem:[%s3 + $0x8] sm:$0xf]
  %v529 = vld [vmem:[%s3 + $0xc] sm:$0xf]
  %v530 = vld [vmem:[%s4] sm:$0x1]
  %v532 = vperm.slane %v530, 0
  %v538 = vunpack.c.l.b16 %v526
  %v539 = vunpack.c.l.b16 %v527
  %v540 = vunpack.c.l.b16 %v528
  %v541 = vunpack.c.l.b16 %v529
  %v542 = vpack.c.b16 %v539, %v538
  %v543 = vpack.c.b16 %v541, %v540
  %v547 = vsel %vm330, %v518, 0
  %v550 = vsel %vm330, %v519, 0
  %v553 = vsel %vm330, %v520, 0
  %v556 = vsel %vm330, %v521, 0
  %v559 = vsel %vm330, %v522, 0
  %v562 = vsel %vm330, %v523, 0
  %v565 = vsel %vm330, %v524, 0
  %v568 = vsel %vm330, %v525, 0
  %570 = vmatpush.bf16.msra.mxu0 0
  %571 = vmatpush.bf16.msra.mxu0 0
  %572 = vmatpush.bf16.msra.mxu0 0
  %573 = vmatpush.bf16.msra.mxu0 0
  %574 = vmatpush.bf16.msra.mxu0 0
  %575 = vmatpush.bf16.msra.mxu0 0
  %576 = vmatpush.bf16.msra.mxu0 %v543
  %577 = vmatpush.bf16.msra.mxu0 %v542
  %578 = vmatmul.bf16.gmra.mxu0 %v547
  %v579 = vpop.f32.mrf.mxu0
  %v580 = vadd.f32 %v532, %v579
  %v581 = vpop.f32.mrf.mxu0
  %v582 = vadd.f32 %v532, %v581
  %583 = vmatmul.bf16.gmra.mxu0 %v550
  %v584 = vpop.f32.mrf.mxu0
  %v585 = vadd.f32 %v532, %v584
  %v586 = vpop.f32.mrf.mxu0
  %v587 = vadd.f32 %v532, %v586
  %588 = vmatmul.bf16.gmra.mxu0 %v553
  %v589 = vpop.f32.mrf.mxu0
  %v590 = vadd.f32 %v532, %v589
  %v591 = vpop.f32.mrf.mxu0
  %v592 = vadd.f32 %v532, %v591
  %593 = vmatmul.bf16.gmra.mxu0 %v556
  %v594 = vpop.f32.mrf.mxu0
  %v595 = vadd.f32 %v532, %v594
  %v596 = vpop.f32.mrf.mxu0
  %v597 = vadd.f32 %v532, %v596
  %598 = vmatmul.bf16.gmra.mxu0 %v559
  %v599 = vpop.f32.mrf.mxu0
  %v600 = vadd.f32 %v532, %v599
  %v601 = vpop.f32.mrf.mxu0
  %v602 = vadd.f32 %v532, %v601
  %603 = vmatmul.bf16.gmra.mxu0 %v562
  %v604 = vpop.f32.mrf.mxu0
  %v605 = vadd.f32 %v532, %v604
  %v606 = vpop.f32.mrf.mxu0
  %v607 = vadd.f32 %v532, %v606
  %608 = vmatmul.bf16.gmra.mxu0 %v565
  %v609 = vpop.f32.mrf.mxu0
  %v610 = vadd.f32 %v532, %v609
  %v611 = vpop.f32.mrf.mxu0
  %v612 = vadd.f32 %v532, %v611
  %613 = vmatmul.bf16.gmra.mxu0 %v568
  %v614 = vpop.f32.mrf.mxu0
  %v615 = vadd.f32 %v532, %v614
  %v616 = vpop.f32.mrf.mxu0
  %v617 = vadd.f32 %v532, %v616
  %618 = vdwg.mxu0
  %v619 = vld [vmem:[%s5] sm:$0xf]
  %v620 = vld [vmem:[%s5 + $0x4] sm:$0xf]
  %v621 = vld [vmem:[%s5 + $0x8] sm:$0xf]
  %v622 = vld [vmem:[%s5 + $0xc] sm:$0xf]
  %v623 = vld [vmem:[%s5 + $0x10] sm:$0xf]
  %v624 = vld [vmem:[%s5 + $0x14] sm:$0xf]
  %v625 = vld [vmem:[%s5 + $0x18] sm:$0xf]
  %v626 = vld [vmem:[%s5 + $0x1c] sm:$0xf]
  %v627 = vld [vmem:[%s5 + $0x20] sm:$0xf]
  %v628 = vld [vmem:[%s5 + $0x24] sm:$0xf]
  %v629 = vld [vmem:[%s5 + $0x28] sm:$0xf]
  %v630 = vld [vmem:[%s5 + $0x2c] sm:$0xf]
  %v631 = vld [vmem:[%s5 + $0x30] sm:$0xf]
  %v632 = vld [vmem:[%s5 + $0x34] sm:$0xf]
  %v633 = vld [vmem:[%s5 + $0x38] sm:$0xf]
  %v634 = vld [vmem:[%s5 + $0x3c] sm:$0xf]
  %v635 = vld [vmem:[%s6] sm:$0xf]
  %v636 = vld [vmem:[%s6 + $0x4] sm:$0xf]
  %v637 = vld [vmem:[%s6 + $0x8] sm:$0xf]
  %v638 = vld [vmem:[%s6 + $0xc] sm:$0xf]
  %v639 = vld [vmem:[%s6 + $0x10] sm:$0xf]
  %v640 = vld [vmem:[%s6 + $0x14] sm:$0xf]
  %v641 = vld [vmem:[%s6 + $0x18] sm:$0xf]
  %v642 = vld [vmem:[%s6 + $0x1c] sm:$0xf]
  %v659 = vunpack.c.l.b16 %v619
  %v660 = vunpack.c.l.b16 %v620
  %v661 = vunpack.c.l.b16 %v621
  %v662 = vunpack.c.l.b16 %v622
  %v663 = vunpack.c.l.b16 %v623
  %v664 = vunpack.c.l.b16 %v624
  %v665 = vunpack.c.l.b16 %v625
  %v666 = vunpack.c.l.b16 %v626
  %v667 = vunpack.c.l.b16 %v627
  %v668 = vunpack.c.l.b16 %v628
  %v669 = vunpack.c.l.b16 %v629
  %v670 = vunpack.c.l.b16 %v630
  %v671 = vunpack.c.l.b16 %v631
  %v672 = vunpack.c.l.b16 %v632
  %v673 = vunpack.c.l.b16 %v633
  %v674 = vunpack.c.l.b16 %v634
  %v675 = vpack.c.b16 %v660, %v659
  %v676 = vpack.c.b16 %v662, %v661
  %v677 = vpack.c.b16 %v664, %v663
  %v678 = vpack.c.b16 %v666, %v665
  %v679 = vpack.c.b16 %v668, %v667
  %v680 = vpack.c.b16 %v670, %v669
  %v681 = vpack.c.b16 %v672, %v671
  %v682 = vpack.c.b16 %v674, %v673
  %v691 = vunpack.c.l.b16 %v635
  %v692 = vunpack.c.l.b16 %v636
  %v693 = vunpack.c.l.b16 %v637
  %v694 = vunpack.c.l.b16 %v638
  %v695 = vunpack.c.l.b16 %v639
  %v696 = vunpack.c.l.b16 %v640
  %v697 = vunpack.c.l.b16 %v641
  %v698 = vunpack.c.l.b16 %v642
  %v699 = vpack.c.b16 %v692, %v691
  %v700 = vpack.c.b16 %v694, %v693
  %v701 = vpack.c.b16 %v696, %v695
  %v702 = vpack.c.b16 %v698, %v697
  %vm707 = vcmask 523264
  %v709 = vsel %vm707, %v675, 0
  %v712 = vsel %vm707, %v676, 0
  %v715 = vsel %vm707, %v677, 0
  %v718 = vsel %vm707, %v678, 0
  %v721 = vsel %vm707, %v679, 0
  %v724 = vsel %vm707, %v680, 0
  %v727 = vsel %vm707, %v681, 0
  %v730 = vsel %vm707, %v682, 0
  %732 = vmatpush.bf16.msra.mxu0 0
  %733 = vmatpush.bf16.msra.mxu0 0
  %734 = vmatpush.bf16.msra.mxu0 0
  %735 = vmatpush.bf16.msra.mxu0 0
  %736 = vmatpush.bf16.msra.mxu0 %v702
  %737 = vmatpush.bf16.msra.mxu0 %v701
  %738 = vmatpush.bf16.msra.mxu0 %v700
  %739 = vmatpush.bf16.msra.mxu0 %v699
  %740 = vmatmul.bf16.gmra.mxu0 %v709
  %v741 = vpop.f32.mrf.mxu0
  %v742 = vadd.f32 0.0, %v741
  %v743 = vpop.f32.mrf.mxu0
  %v744 = vadd.f32 0.0, %v743
  %745 = vmatmul.bf16.gmra.mxu0 %v712
  %v746 = vpop.f32.mrf.mxu0
  %v747 = vadd.f32 0.0, %v746
  %v748 = vpop.f32.mrf.mxu0
  %v749 = vadd.f32 0.0, %v748
  %750 = vmatmul.bf16.gmra.mxu0 %v715
  %v751 = vpop.f32.mrf.mxu0
  %v752 = vadd.f32 0.0, %v751
  %v753 = vpop.f32.mrf.mxu0
  %v754 = vadd.f32 0.0, %v753
  %755 = vmatmul.bf16.gmra.mxu0 %v718
  %v756 = vpop.f32.mrf.mxu0
  %v757 = vadd.f32 0.0, %v756
  %v758 = vpop.f32.mrf.mxu0
  %v759 = vadd.f32 0.0, %v758
  %760 = vmatmul.bf16.gmra.mxu0 %v721
  %v761 = vpop.f32.mrf.mxu0
  %v762 = vadd.f32 0.0, %v761
  %v763 = vpop.f32.mrf.mxu0
  %v764 = vadd.f32 0.0, %v763
  %765 = vmatmul.bf16.gmra.mxu0 %v724
  %v766 = vpop.f32.mrf.mxu0
  %v767 = vadd.f32 0.0, %v766
  %v768 = vpop.f32.mrf.mxu0
  %v769 = vadd.f32 0.0, %v768
  %770 = vmatmul.bf16.gmra.mxu0 %v727
  %v771 = vpop.f32.mrf.mxu0
  %v772 = vadd.f32 0.0, %v771
  %v773 = vpop.f32.mrf.mxu0
  %v774 = vadd.f32 0.0, %v773
  %775 = vmatmul.bf16.gmra.mxu0 %v730
  %v776 = vpop.f32.mrf.mxu0
  %v777 = vadd.f32 0.0, %v776
  %v778 = vpop.f32.mrf.mxu0
  %v779 = vadd.f32 0.0, %v778
  %780 = vdwg.mxu0
  %v781 = vadd.f32 %v580, %v742
  %v782 = vadd.f32 %v582, %v744
  %v783 = vadd.f32 %v585, %v747
  %v784 = vadd.f32 %v587, %v749
  %v785 = vadd.f32 %v590, %v752
  %v786 = vadd.f32 %v592, %v754
  %v787 = vadd.f32 %v595, %v757
  %v788 = vadd.f32 %v597, %v759
  %v789 = vadd.f32 %v600, %v762
  %v790 = vadd.f32 %v602, %v764
  %v791 = vadd.f32 %v605, %v767
  %v792 = vadd.f32 %v607, %v769
  %v793 = vadd.f32 %v610, %v772
  %v794 = vadd.f32 %v612, %v774
  %v795 = vadd.f32 %v615, %v777
  %v796 = vadd.f32 %v617, %v779
  %v797 = vld [vmem:[%s7] sm:$0x1]
  %v799 = vperm.slane %v797, 0
  %v801 = vadd.f32 %v781, %v799
  %v802 = vadd.f32 %v782, %v799
  %v803 = vadd.f32 %v783, %v799
  %v804 = vadd.f32 %v784, %v799
  %v805 = vadd.f32 %v785, %v799
  %v806 = vadd.f32 %v786, %v799
  %v807 = vadd.f32 %v787, %v799
  %v808 = vadd.f32 %v788, %v799
  %v809 = vadd.f32 %v789, %v799
  %v810 = vadd.f32 %v790, %v799
  %v811 = vadd.f32 %v791, %v799
  %v812 = vadd.f32 %v792, %v799
  %v813 = vadd.f32 %v793, %v799
  %v814 = vadd.f32 %v794, %v799
  %v815 = vadd.f32 %v795, %v799
  %v816 = vadd.f32 %v796, %v799
  %v817 = vmax.f32 %v801, 0.0
  %v818 = vmax.f32 %v802, 0.0
  %v819 = vmax.f32 %v803, 0.0
  %v820 = vmax.f32 %v804, 0.0
  %v821 = vmax.f32 %v805, 0.0
  %v822 = vmax.f32 %v806, 0.0
  %v823 = vmax.f32 %v807, 0.0
  %v824 = vmax.f32 %v808, 0.0
  %v825 = vmax.f32 %v809, 0.0
  %v826 = vmax.f32 %v810, 0.0
  %v827 = vmax.f32 %v811, 0.0
  %v828 = vmax.f32 %v812, 0.0
  %v829 = vmax.f32 %v813, 0.0
  %v830 = vmax.f32 %v814, 0.0
  %v831 = vmax.f32 %v815, 0.0
  %v832 = vmax.f32 %v816, 0.0
  %v833 = vpack.c.bf16 %v817, %v817
  %v834 = vpack.c.bf16 %v818, %v818
  %v835 = vpack.c.bf16 %v819, %v819
  %v836 = vpack.c.bf16 %v820, %v820
  %v837 = vpack.c.bf16 %v821, %v821
  %v838 = vpack.c.bf16 %v822, %v822
  %v839 = vpack.c.bf16 %v823, %v823
  %v840 = vpack.c.bf16 %v824, %v824
  %v841 = vpack.c.bf16 %v825, %v825
  %v842 = vpack.c.bf16 %v826, %v826
  %v843 = vpack.c.bf16 %v827, %v827
  %v844 = vpack.c.bf16 %v828, %v828
  %v845 = vpack.c.bf16 %v829, %v829
  %v846 = vpack.c.bf16 %v830, %v830
  %v847 = vpack.c.bf16 %v831, %v831
  %v848 = vpack.c.bf16 %v832, %v832
  %849 = vst [vmem:[%s8] sm:$0xf] %v833
  %850 = vst [vmem:[%s8 + $0x4] sm:$0xf] %v834
  %851 = vst [vmem:[%s8 + $0x8] sm:$0xf] %v835
  %852 = vst [vmem:[%s8 + $0xc] sm:$0xf] %v836
  %853 = vst [vmem:[%s8 + $0x10] sm:$0xf] %v837
  %854 = vst [vmem:[%s8 + $0x14] sm:$0xf] %v838
  %855 = vst [vmem:[%s8 + $0x18] sm:$0xf] %v839
  %856 = vst [vmem:[%s8 + $0x1c] sm:$0xf] %v840
  %857 = vst [vmem:[%s8 + $0x20] sm:$0xf] %v841
  %858 = vst [vmem:[%s8 + $0x24] sm:$0xf] %v842
  %859 = vst [vmem:[%s8 + $0x28] sm:$0xf] %v843
  %860 = vst [vmem:[%s8 + $0x2c] sm:$0xf] %v844
  %861 = vst [vmem:[%s8 + $0x30] sm:$0xf] %v845
  %862 = vst [vmem:[%s8 + $0x34] sm:$0xf] %v846
  %863 = vst [vmem:[%s8 + $0x38] sm:$0xf] %v847
  %864 = vst [vmem:[%s8 + $0x3c] sm:$0xf] %v848
  // Predicated region
  $region34: #{forward_two_blocks.5} parent=0 // pred_check
    _
  $region35: #{forward_two_blocks.5} parent=0 // pred_check_branch
    %866 = sbr.rel (0) target = $region37
  $region36: #{forward_two_blocks.5} parent=0 // pred_region
    _
  $region37: #{forward_two_blocks.5} parent=0 // pred_fallthru
    _
  // Predicated region
  $region38: #{forward_two_blocks.5} parent=0 // pred_check
    _
  $region39: #{forward_two_blocks.5} parent=0 // pred_check_branch
    %868 = sbr.rel (0) target = $region41
  $region40: #{forward_two_blocks.5} parent=0 // pred_region
    _
  $region41: #{forward_two_blocks.5} parent=0 // pred_fallthru
    _

// kernel: forward_two_blocks.7
$region0: #{forward_two_blocks.7}
  #allocation0 [shape = 'u32[]', space=smem, size = 0x4, offset = 0x4, fixed_abs, tag = 'smem constant byte address 0x4 - core index']
  #allocation1 [shape = 'u32[72,128]{1,0:T(1,128)}', space=vmem, size = 0x9000, scoped, tag = 'internal scratch']
  %s0 = inlined_call_operand.vmem [shape: bf16[128,288], index: 0, kind: input, shape index: {}]
  %s1 = inlined_call_operand.vmem [shape: bf16[288,32], index: 1, kind: input, shape index: {}]
  %s2 = inlined_call_operand.vmem [shape: f32[1,32], index: 2, kind: input, shape index: {}]
  %s3 = inlined_call_operand.vmem [shape: bf16[32,128], index: 3, kind: input, shape index: {}]
  %s4 = inlined_call_operand.vmem [shape: f32[1,128], index: 4, kind: input, shape index: {}]
  %s5 = inlined_call_operand.vmem [shape: bf16[128,128], index: 5, kind: input, shape index: {}]
  %s6 = inlined_call_operand.vmem [shape: bf16[128,128], index: 6, kind: output, shape index: {}]
  %s7 = sld [smem:[#allocation0]]
  $region34: #{forward_two_blocks.7} parent=0
    _
  %s9 = ssub.s32 1, %s7
  %s10 = scalar_select 0, %s9, %s7
  // Predicated region
  $region2: #{forward_two_blocks.7} parent=0 // pred_check
    _
  $region3: #{forward_two_blocks.7} parent=0 // pred_check_branch
    %12 = sbr.rel (0) target = $region5
  $region4: #{forward_two_blocks.7} parent=0 // pred_region
    _
  $region5: #{forward_two_blocks.7} parent=0 // pred_fallthru
    _
  // Predicated region
  $region6: #{forward_two_blocks.7} parent=0 // pred_check
    _
  $region7: #{forward_two_blocks.7} parent=0 // pred_check_branch
    %14 = sbr.rel (0) target = $region9
  $region8: #{forward_two_blocks.7} parent=0 // pred_region
    _
  $region9: #{forward_two_blocks.7} parent=0 // pred_fallthru
    _
  // Predicated region
  $region10: #{forward_two_blocks.7} parent=0 // pred_check
    _
  $region11: #{forward_two_blocks.7} parent=0 // pred_check_branch
    %16 = sbr.rel (0) target = $region13
  $region12: #{forward_two_blocks.7} parent=0 // pred_region
    _
  $region13: #{forward_two_blocks.7} parent=0 // pred_fallthru
    _
  // Predicated region
  $region14: #{forward_two_blocks.7} parent=0 // pred_check
    _
  $region15: #{forward_two_blocks.7} parent=0 // pred_check_branch
    %18 = sbr.rel (0) target = $region17
  $region16: #{forward_two_blocks.7} parent=0 // pred_region
    _
  $region17: #{forward_two_blocks.7} parent=0 // pred_fallthru
    _
  // Predicated region
  $region18: #{forward_two_blocks.7} parent=0 // pred_check
    _
  $region19: #{forward_two_blocks.7} parent=0 // pred_check_branch
    %20 = sbr.rel (0) target = $region21
  $region20: #{forward_two_blocks.7} parent=0 // pred_region
    _
  $region21: #{forward_two_blocks.7} parent=0 // pred_fallthru
    _
  // Predicated region
  $region22: #{forward_two_blocks.7} parent=0 // pred_check
    _
  $region23: #{forward_two_blocks.7} parent=0 // pred_check_branch
    %22 = sbr.rel (0) target = $region25
  $region24: #{forward_two_blocks.7} parent=0 // pred_region
    _
  $region25: #{forward_two_blocks.7} parent=0 // pred_fallthru
    _
  %v24 = vld [vmem:[%s0] sm:$0xff]
  %v25 = vld [vmem:[%s0 + $0x8] sm:$0xf]
  %v26 = vld [vmem:[%s0 + $0xc] sm:$0xff]
  %v27 = vld [vmem:[%s0 + $0x14] sm:$0xf]
  %v28 = vld [vmem:[%s0 + $0x18] sm:$0xff]
  %v29 = vld [vmem:[%s0 + $0x20] sm:$0xf]
  %v30 = vld [vmem:[%s0 + $0x24] sm:$0xff]
  %v31 = vld [vmem:[%s0 + $0x2c] sm:$0xf]
  %v32 = vld [vmem:[%s0 + $0x30] sm:$0xff]
  %v33 = vld [vmem:[%s0 + $0x38] sm:$0xf]
  %v34 = vld [vmem:[%s0 + $0x3c] sm:$0xff]
  %v35 = vld [vmem:[%s0 + $0x44] sm:$0xf]
  %v36 = vld [vmem:[%s0 + $0x48] sm:$0xff]
  %v37 = vld [vmem:[%s0 + $0x50] sm:$0xf]
  %v38 = vld [vmem:[%s0 + $0x54] sm:$0xff]
  %v39 = vld [vmem:[%s0 + $0x5c] sm:$0xf]
  %v40 = vld [vmem:[%s0 + $0x60] sm:$0xff]
  %v41 = vld [vmem:[%s0 + $0x68] sm:$0xf]
  %v42 = vld [vmem:[%s0 + $0x6c] sm:$0xff]
  %v43 = vld [vmem:[%s0 + $0x74] sm:$0xf]
  %v44 = vld [vmem:[%s0 + $0x78] sm:$0xff]
  %v45 = vld [vmem:[%s0 + $0x80] sm:$0xf]
  %v46 = vld [vmem:[%s0 + $0x84] sm:$0xff]
  %v47 = vld [vmem:[%s0 + $0x8c] sm:$0xf]
  %v48 = vld [vmem:[%s0 + $0x90] sm:$0xff]
  %v49 = vld [vmem:[%s0 + $0x98] sm:$0xf]
  %v50 = vld [vmem:[%s0 + $0x9c] sm:$0xff]
  %v51 = vld [vmem:[%s0 + $0xa4] sm:$0xf]
  %v52 = vld [vmem:[%s0 + $0xa8] sm:$0xff]
  %v53 = vld [vmem:[%s0 + $0xb0] sm:$0xf]
  %v54 = vld [vmem:[%s0 + $0xb4] sm:$0xff]
  %v55 = vld [vmem:[%s0 + $0xbc] sm:$0xf]
  %v56 = vld [vmem:[%s1] sm:$0xf]
  %v57 = vld [vmem:[%s1 + $0x4] sm:$0xf]
  %v58 = vld [vmem:[%s1 + $0x8] sm:$0xf]
  %v59 = vld [vmem:[%s1 + $0xc] sm:$0xf]
  %v60 = vld [vmem:[%s1 + $0x10] sm:$0xf]
  %v61 = vld [vmem:[%s1 + $0x14] sm:$0xf]
  %v62 = vld [vmem:[%s1 + $0x18] sm:$0xf]
  %v63 = vld [vmem:[%s1 + $0x1c] sm:$0xf]
  %v64 = vld [vmem:[%s1 + $0x20] sm:$0xf]
  %v65 = vld [vmem:[%s1 + $0x24] sm:$0xf]
  %v66 = vld [vmem:[%s1 + $0x28] sm:$0xf]
  %v67 = vld [vmem:[%s1 + $0x2c] sm:$0xf]
  %v68 = vld [vmem:[%s1 + $0x30] sm:$0xf]
  %v69 = vld [vmem:[%s1 + $0x34] sm:$0xf]
  %v70 = vld [vmem:[%s1 + $0x38] sm:$0xf]
  %v71 = vld [vmem:[%s1 + $0x3c] sm:$0xf]
  %v72 = vld [vmem:[%s1 + $0x40] sm:$0xf]
  %v73 = vld [vmem:[%s1 + $0x44] sm:$0xf]
  %v74 = vld [vmem:[%s1 + $0x48] sm:$0xf]
  %v75 = vld [vmem:[%s1 + $0x4c] sm:$0xf]
  %v76 = vld [vmem:[%s1 + $0x50] sm:$0xf]
  %v77 = vld [vmem:[%s1 + $0x54] sm:$0xf]
  %v78 = vld [vmem:[%s1 + $0x58] sm:$0xf]
  %v79 = vld [vmem:[%s1 + $0x5c] sm:$0xf]
  %v80 = vld [vmem:[%s1 + $0x60] sm:$0xf]
  %v81 = vld [vmem:[%s1 + $0x64] sm:$0xf]
  %v82 = vld [vmem:[%s1 + $0x68] sm:$0xf]
  %v83 = vld [vmem:[%s1 + $0x6c] sm:$0xf]
  %v84 = vld [vmem:[%s1 + $0x70] sm:$0xf]
  %v85 = vld [vmem:[%s1 + $0x74] sm:$0xf]
  %v86 = vld [vmem:[%s1 + $0x78] sm:$0xf]
  %v87 = vld [vmem:[%s1 + $0x7c] sm:$0xf]
  %v88 = vld [vmem:[%s1 + $0x80] sm:$0xf]
  %v89 = vld [vmem:[%s1 + $0x84] sm:$0xf]
  %v90 = vld [vmem:[%s1 + $0x88] sm:$0xf]
  %v91 = vld [vmem:[%s1 + $0x8c] sm:$0xf]
  %v92 = vld [vmem:[%s2] sm:$0x1]
  %v94 = vperm.slane %v92, 0
  %v128 = vunpack.c.l.b16 %v24
  %v129 = vunpack.c.h.b16 %v24
  %v130 = vunpack.c.l.b16 %v25
  %v131 = vunpack.c.l.b16 %v26
  %v132 = vunpack.c.h.b16 %v26
  %v133 = vunpack.c.l.b16 %v27
  %v134 = vunpack.c.l.b16 %v28
  %v135 = vunpack.c.h.b16 %v28
  %v136 = vunpack.c.l.b16 %v29
  %v137 = vunpack.c.l.b16 %v30
  %v138 = vunpack.c.h.b16 %v30
  %v139 = vunpack.c.l.b16 %v31
  %v140 = vunpack.c.l.b16 %v32
  %v141 = vunpack.c.h.b16 %v32
  %v142 = vunpack.c.l.b16 %v33
  %v143 = vunpack.c.l.b16 %v34
  %v144 = vunpack.c.h.b16 %v34
  %v145 = vunpack.c.l.b16 %v35
  %v146 = vunpack.c.l.b16 %v36
  %v147 = vunpack.c.h.b16 %v36
  %v148 = vunpack.c.l.b16 %v37
  %v149 = vunpack.c.l.b16 %v38
  %v150 = vunpack.c.h.b16 %v38
  %v151 = vunpack.c.l.b16 %v39
  %v152 = vunpack.c.l.b16 %v40
  %v153 = vunpack.c.h.b16 %v40
  %v154 = vunpack.c.l.b16 %v41
  %v155 = vunpack.c.l.b16 %v42
  %v156 = vunpack.c.h.b16 %v42
  %v157 = vunpack.c.l.b16 %v43
  %v158 = vunpack.c.l.b16 %v44
  %v159 = vunpack.c.h.b16 %v44
  %v160 = vunpack.c.l.b16 %v45
  %v161 = vunpack.c.l.b16 %v46
  %v162 = vunpack.c.h.b16 %v46
  %v163 = vunpack.c.l.b16 %v47
  %v164 = vunpack.c.l.b16 %v48
  %v165 = vunpack.c.h.b16 %v48
  %v166 = vunpack.c.l.b16 %v49
  %v167 = vunpack.c.l.b16 %v50
  %v168 = vunpack.c.h.b16 %v50
  %v169 = vunpack.c.l.b16 %v51
  %v170 = vunpack.c.l.b16 %v52
  %v171 = vunpack.c.h.b16 %v52
  %v172 = vunpack.c.l.b16 %v53
  %v173 = vunpack.c.l.b16 %v54
  %v174 = vunpack.c.h.b16 %v54
  %v175 = vunpack.c.l.b16 %v55
  %v176 = vpack.c.b16 %v131, %v128
  %v177 = vpack.c.b16 %v132, %v129
  %v178 = vpack.c.b16 %v133, %v130
  %v179 = vpack.c.b16 %v137, %v134
  %v180 = vpack.c.b16 %v138, %v135
  %v181 = vpack.c.b16 %v139, %v136
  %v182 = vpack.c.b16 %v143, %v140
  %v183 = vpack.c.b16 %v144, %v141
  %v184 = vpack.c.b16 %v145, %v142
  %v185 = vpack.c.b16 %v149, %v146
  %v186 = vpack.c.b16 %v150, %v147
  %v187 = vpack.c.b16 %v151, %v148
  %v188 = vpack.c.b16 %v155, %v152
  %v189 = vpack.c.b16 %v156, %v153
  %v190 = vpack.c.b16 %v157, %v154
  %v191 = vpack.c.b16 %v161, %v158
  %v192 = vpack.c.b16 %v162, %v159
  %v193 = vpack.c.b16 %v163, %v160
  %v194 = vpack.c.b16 %v167, %v164
  %v195 = vpack.c.b16 %v168, %v165
  %v196 = vpack.c.b16 %v169, %v166
  %v197 = vpack.c.b16 %v173, %v170
  %v198 = vpack.c.b16 %v174, %v171
  %v199 = vpack.c.b16 %v175, %v172
  %v252 = vunpack.c.l.b16 %v56
  %v253 = vunpack.c.l.b16 %v57
  %v254 = vunpack.c.l.b16 %v58
  %v255 = vunpack.c.l.b16 %v59
  %v256 = vunpack.c.l.b16 %v60
  %v257 = vunpack.c.l.b16 %v61
  %v258 = vunpack.c.l.b16 %v62
  %v259 = vunpack.c.l.b16 %v63
  %v260 = vunpack.c.l.b16 %v64
  %v261 = vunpack.c.l.b16 %v65
  %v262 = vunpack.c.l.b16 %v66
  %v263 = vunpack.c.l.b16 %v67
  %v264 = vunpack.c.l.b16 %v68
  %v265 = vunpack.c.l.b16 %v69
  %v266 = vunpack.c.l.b16 %v70
  %v267 = vunpack.c.l.b16 %v71
  %v268 = vunpack.c.l.b16 %v72
  %v269 = vunpack.c.l.b16 %v73
  %v270 = vunpack.c.l.b16 %v74
  %v271 = vunpack.c.l.b16 %v75
  %v272 = vunpack.c.l.b16 %v76
  %v273 = vunpack.c.l.b16 %v77
  %v274 = vunpack.c.l.b16 %v78
  %v275 = vunpack.c.l.b16 %v79
  %v276 = vunpack.c.l.b16 %v80
  %v277 = vunpack.c.l.b16 %v81
  %v278 = vunpack.c.l.b16 %v82
  %v279 = vunpack.c.l.b16 %v83
  %v280 = vunpack.c.l.b16 %v84
  %v281 = vunpack.c.l.b16 %v85
  %v282 = vunpack.c.l.b16 %v86
  %v283 = vunpack.c.l.b16 %v87
  %v284 = vunpack.c.l.b16 %v88
  %v285 = vunpack.c.l.b16 %v89
  %v286 = vunpack.c.l.b16 %v90
  %v287 = vunpack.c.l.b16 %v91
  %v288 = vpack.c.b16 %v253, %v252
  %v289 = vpack.c.b16 %v255, %v254
  %v290 = vpack.c.b16 %v257, %v256
  %v291 = vpack.c.b16 %v259, %v258
  %v292 = vpack.c.b16 %v261, %v260
  %v293 = vpack.c.b16 %v263, %v262
  %v294 = vpack.c.b16 %v265, %v264
  %v295 = vpack.c.b16 %v267, %v266
  %v296 = vpack.c.b16 %v269, %v268
  %v297 = vpack.c.b16 %v271, %v270
  %v298 = vpack.c.b16 %v273, %v272
  %v299 = vpack.c.b16 %v275, %v274
  %v300 = vpack.c.b16 %v277, %v276
  %v301 = vpack.c.b16 %v279, %v278
  %v302 = vpack.c.b16 %v281, %v280
  %v303 = vpack.c.b16 %v283, %v282
  %v304 = vpack.c.b16 %v285, %v284
  %v305 = vpack.c.b16 %v287, %v286
  %vm324 = vcmask 261120
  %v326 = vsel %vm324, %v178, 0
  %v329 = vsel %vm324, %v181, 0
  %v332 = vsel %vm324, %v184, 0
  %v335 = vsel %vm324, %v187, 0
  %v338 = vsel %vm324, %v190, 0
  %v341 = vsel %vm324, %v193, 0
  %v344 = vsel %vm324, %v196, 0
  %v347 = vsel %vm324, %v199, 0
  %349 = vmatpush.bf16.msra.mxu0 %v295
  %350 = vmatpush.bf16.msra.mxu0 %v294
  %351 = vmatpush.bf16.msra.mxu0 %v293
  %352 = vmatpush.bf16.msra.mxu0 %v292
  %353 = vmatpush.bf16.msra.mxu0 %v291
  %354 = vmatpush.bf16.msra.mxu0 %v290
  %355 = vmatpush.bf16.msra.mxu0 %v289
  %356 = vmatpush.bf16.msra.mxu0 %v288
  %357 = vmatmul.bf16.gmra.mxu0 %v176
  %v358 = vpop.f32.mrf.mxu0
  %v359 = vadd.f32 %v94, %v358
  %v360 = vpop.f32.mrf.mxu0
  %v361 = vadd.f32 %v94, %v360
  %362 = vmatmul.bf16.gmra.mxu0 %v179
  %v363 = vpop.f32.mrf.mxu0
  %v364 = vadd.f32 %v94, %v363
  %v365 = vpop.f32.mrf.mxu0
  %v366 = vadd.f32 %v94, %v365
  %367 = vmatmul.bf16.gmra.mxu0 %v182
  %v368 = vpop.f32.mrf.mxu0
  %v369 = vadd.f32 %v94, %v368
  %v370 = vpop.f32.mrf.mxu0
  %v371 = vadd.f32 %v94, %v370
  %372 = vmatmul.bf16.gmra.mxu0 %v185
  %v373 = vpop.f32.mrf.mxu0
  %v374 = vadd.f32 %v94, %v373
  %v375 = vpop.f32.mrf.mxu0
  %v376 = vadd.f32 %v94, %v375
  %377 = vmatmul.bf16.gmra.mxu0 %v188
  %v378 = vpop.f32.mrf.mxu0
  %v379 = vadd.f32 %v94, %v378
  %v380 = vpop.f32.mrf.mxu0
  %v381 = vadd.f32 %v94, %v380
  %382 = vmatmul.bf16.gmra.mxu0 %v191
  %v383 = vpop.f32.mrf.mxu0
  %v384 = vadd.f32 %v94, %v383
  %v385 = vpop.f32.mrf.mxu0
  %v386 = vadd.f32 %v94, %v385
  %387 = vmatmul.bf16.gmra.mxu0 %v194
  %v388 = vpop.f32.mrf.mxu0
  %v389 = vadd.f32 %v94, %v388
  %v390 = vpop.f32.mrf.mxu0
  %v391 = vadd.f32 %v94, %v390
  %392 = vmatmul.bf16.gmra.mxu0 %v197
  %v393 = vpop.f32.mrf.mxu0
  %v394 = vadd.f32 %v94, %v393
  %v395 = vpop.f32.mrf.mxu0
  %v396 = vadd.f32 %v94, %v395
  %397 = vdwg.mxu0
  %398 = vmatpush.bf16.msra.mxu0 %v303
  %399 = vmatpush.bf16.msra.mxu0 %v302
  %400 = vmatpush.bf16.msra.mxu0 %v301
  %401 = vmatpush.bf16.msra.mxu0 %v300
  %402 = vmatpush.bf16.msra.mxu0 %v299
  %403 = vmatpush.bf16.msra.mxu0 %v298
  %404 = vmatpush.bf16.msra.mxu0 %v297
  %405 = vmatpush.bf16.msra.mxu0 %v296
  %406 = vmatmul.bf16.gmra.mxu0 %v177
  %v407 = vpop.f32.mrf.mxu0
  %v408 = vadd.f32 %v359, %v407
  %v409 = vpop.f32.mrf.mxu0
  %v410 = vadd.f32 %v361, %v409
  %411 = vmatmul.bf16.gmra.mxu0 %v180
  %v412 = vpop.f32.mrf.mxu0
  %v413 = vadd.f32 %v364, %v412
  %v414 = vpop.f32.mrf.mxu0
  %v415 = vadd.f32 %v366, %v414
  %416 = vmatmul.bf16.gmra.mxu0 %v183
  %v417 = vpop.f32.mrf.mxu0
  %v418 = vadd.f32 %v369, %v417
  %v419 = vpop.f32.mrf.mxu0
  %v420 = vadd.f32 %v371, %v419
  %421 = vmatmul.bf16.gmra.mxu0 %v186
  %v422 = vpop.f32.mrf.mxu0
  %v423 = vadd.f32 %v374, %v422
  %v424 = vpop.f32.mrf.mxu0
  %v425 = vadd.f32 %v376, %v424
  %426 = vmatmul.bf16.gmra.mxu0 %v189
  %v427 = vpop.f32.mrf.mxu0
  %v428 = vadd.f32 %v379, %v427
  %v429 = vpop.f32.mrf.mxu0
  %v430 = vadd.f32 %v381, %v429
  %431 = vmatmul.bf16.gmra.mxu0 %v192
  %v432 = vpop.f32.mrf.mxu0
  %v433 = vadd.f32 %v384, %v432
  %v434 = vpop.f32.mrf.mxu0
  %v435 = vadd.f32 %v386, %v434
  %436 = vmatmul.bf16.gmra.mxu0 %v195
  %v437 = vpop.f32.mrf.mxu0
  %v438 = vadd.f32 %v389, %v437
  %v439 = vpop.f32.mrf.mxu0
  %v440 = vadd.f32 %v391, %v439
  %441 = vmatmul.bf16.gmra.mxu0 %v198
  %v442 = vpop.f32.mrf.mxu0
  %v443 = vadd.f32 %v394, %v442
  %v444 = vpop.f32.mrf.mxu0
  %v445 = vadd.f32 %v396, %v444
  %446 = vdwg.mxu0
  %447 = vmatpush.bf16.msra.mxu0 0
  %448 = vmatpush.bf16.msra.mxu0 0
  %449 = vmatpush.bf16.msra.mxu0 0
  %450 = vmatpush.bf16.msra.mxu0 0
  %451 = vmatpush.bf16.msra.mxu0 0
  %452 = vmatpush.bf16.msra.mxu0 0
  %453 = vmatpush.bf16.msra.mxu0 %v305
  %454 = vmatpush.bf16.msra.mxu0 %v304
  %455 = vmatmul.bf16.gmra.mxu0 %v326
  %v456 = vpop.f32.mrf.mxu0
  %v457 = vadd.f32 %v408, %v456
  %v458 = vpop.f32.mrf.mxu0
  %v459 = vadd.f32 %v410, %v458
  %460 = vmatmul.bf16.gmra.mxu0 %v329
  %v461 = vpop.f32.mrf.mxu0
  %v462 = vadd.f32 %v413, %v461
  %v463 = vpop.f32.mrf.mxu0
  %v464 = vadd.f32 %v415, %v463
  %465 = vmatmul.bf16.gmra.mxu0 %v332
  %v466 = vpop.f32.mrf.mxu0
  %v467 = vadd.f32 %v418, %v466
  %v468 = vpop.f32.mrf.mxu0
  %v469 = vadd.f32 %v420, %v468
  %470 = vmatmul.bf16.gmra.mxu0 %v335
  %v471 = vpop.f32.mrf.mxu0
  %v472 = vadd.f32 %v423, %v471
  %v473 = vpop.f32.mrf.mxu0
  %v474 = vadd.f32 %v425, %v473
  %475 = vmatmul.bf16.gmra.mxu0 %v338
  %v476 = vpop.f32.mrf.mxu0
  %v477 = vadd.f32 %v428, %v476
  %v478 = vpop.f32.mrf.mxu0
  %v479 = vadd.f32 %v430, %v478
  %480 = vmatmul.bf16.gmra.mxu0 %v341
  %v481 = vpop.f32.mrf.mxu0
  %v482 = vadd.f32 %v433, %v481
  %v483 = vpop.f32.mrf.mxu0
  %v484 = vadd.f32 %v435, %v483
  %485 = vmatmul.bf16.gmra.mxu0 %v344
  %v486 = vpop.f32.mrf.mxu0
  %v487 = vadd.f32 %v438, %v486
  %v488 = vpop.f32.mrf.mxu0
  %v489 = vadd.f32 %v440, %v488
  %490 = vmatmul.bf16.gmra.mxu0 %v347
  %v491 = vpop.f32.mrf.mxu0
  %v492 = vadd.f32 %v443, %v491
  %v493 = vpop.f32.mrf.mxu0
  %v494 = vadd.f32 %v445, %v493
  %495 = vdwg.mxu0
  %v496 = vmax.f32 %v457, 0.0
  %v497 = vmax.f32 %v459, 0.0
  %v498 = vmax.f32 %v462, 0.0
  %v499 = vmax.f32 %v464, 0.0
  %v500 = vmax.f32 %v467, 0.0
  %v501 = vmax.f32 %v469, 0.0
  %v502 = vmax.f32 %v472, 0.0
  %v503 = vmax.f32 %v474, 0.0
  %v504 = vmax.f32 %v477, 0.0
  %v505 = vmax.f32 %v479, 0.0
  %v506 = vmax.f32 %v482, 0.0
  %v507 = vmax.f32 %v484, 0.0
  %v508 = vmax.f32 %v487, 0.0
  %v509 = vmax.f32 %v489, 0.0
  %v510 = vmax.f32 %v492, 0.0
  %v511 = vmax.f32 %v494, 0.0
  %v512 = vpack.c.bf16 %v497, %v496
  %v513 = vpack.c.bf16 %v499, %v498
  %v514 = vpack.c.bf16 %v501, %v500
  %v515 = vpack.c.bf16 %v503, %v502
  %v516 = vpack.c.bf16 %v505, %v504
  %v517 = vpack.c.bf16 %v507, %v506
  %v518 = vpack.c.bf16 %v509, %v508
  %v519 = vpack.c.bf16 %v511, %v510
  %v520 = vld [vmem:[%s3] sm:$0xf]
  %v521 = vld [vmem:[%s3 + $0x4] sm:$0xf]
  %v522 = vld [vmem:[%s3 + $0x8] sm:$0xf]
  %v523 = vld [vmem:[%s3 + $0xc] sm:$0xf]
  %v524 = vld [vmem:[%s4] sm:$0x1]
  %v526 = vperm.slane %v524, 0
  %v532 = vunpack.c.l.b16 %v520
  %v533 = vunpack.c.l.b16 %v521
  %v534 = vunpack.c.l.b16 %v522
  %v535 = vunpack.c.l.b16 %v523
  %v536 = vpack.c.b16 %v533, %v532
  %v537 = vpack.c.b16 %v535, %v534
  %v541 = vsel %vm324, %v512, 0
  %v544 = vsel %vm324, %v513, 0
  %v547 = vsel %vm324, %v514, 0
  %v550 = vsel %vm324, %v515, 0
  %v553 = vsel %vm324, %v516, 0
  %v556 = vsel %vm324, %v517, 0
  %v559 = vsel %vm324, %v518, 0
  %v562 = vsel %vm324, %v519, 0
  %564 = vmatpush.bf16.msra.mxu0 0
  %565 = vmatpush.bf16.msra.mxu0 0
  %566 = vmatpush.bf16.msra.mxu0 0
  %567 = vmatpush.bf16.msra.mxu0 0
  %568 = vmatpush.bf16.msra.mxu0 0
  %569 = vmatpush.bf16.msra.mxu0 0
  %570 = vmatpush.bf16.msra.mxu0 %v537
  %571 = vmatpush.bf16.msra.mxu0 %v536
  %572 = vmatmul.bf16.gmra.mxu0 %v541
  %v573 = vpop.f32.mrf.mxu0
  %v574 = vadd.f32 %v526, %v573
  %v575 = vpop.f32.mrf.mxu0
  %v576 = vadd.f32 %v526, %v575
  %577 = vmatmul.bf16.gmra.mxu0 %v544
  %v578 = vpop.f32.mrf.mxu0
  %v579 = vadd.f32 %v526, %v578
  %v580 = vpop.f32.mrf.mxu0
  %v581 = vadd.f32 %v526, %v580
  %582 = vmatmul.bf16.gmra.mxu0 %v547
  %v583 = vpop.f32.mrf.mxu0
  %v584 = vadd.f32 %v526, %v583
  %v585 = vpop.f32.mrf.mxu0
  %v586 = vadd.f32 %v526, %v585
  %587 = vmatmul.bf16.gmra.mxu0 %v550
  %v588 = vpop.f32.mrf.mxu0
  %v589 = vadd.f32 %v526, %v588
  %v590 = vpop.f32.mrf.mxu0
  %v591 = vadd.f32 %v526, %v590
  %592 = vmatmul.bf16.gmra.mxu0 %v553
  %v593 = vpop.f32.mrf.mxu0
  %v594 = vadd.f32 %v526, %v593
  %v595 = vpop.f32.mrf.mxu0
  %v596 = vadd.f32 %v526, %v595
  %597 = vmatmul.bf16.gmra.mxu0 %v556
  %v598 = vpop.f32.mrf.mxu0
  %v599 = vadd.f32 %v526, %v598
  %v600 = vpop.f32.mrf.mxu0
  %v601 = vadd.f32 %v526, %v600
  %602 = vmatmul.bf16.gmra.mxu0 %v559
  %v603 = vpop.f32.mrf.mxu0
  %v604 = vadd.f32 %v526, %v603
  %v605 = vpop.f32.mrf.mxu0
  %v606 = vadd.f32 %v526, %v605
  %607 = vmatmul.bf16.gmra.mxu0 %v562
  %v608 = vpop.f32.mrf.mxu0
  %v609 = vadd.f32 %v526, %v608
  %v610 = vpop.f32.mrf.mxu0
  %v611 = vadd.f32 %v526, %v610
  %612 = vdwg.mxu0
  %v613 = vld [vmem:[%s5] sm:$0xf]
  %v614 = vld [vmem:[%s5 + $0x4] sm:$0xf]
  %v615 = vld [vmem:[%s5 + $0x8] sm:$0xf]
  %v616 = vld [vmem:[%s5 + $0xc] sm:$0xf]
  %v617 = vld [vmem:[%s5 + $0x10] sm:$0xf]
  %v618 = vld [vmem:[%s5 + $0x14] sm:$0xf]
  %v619 = vld [vmem:[%s5 + $0x18] sm:$0xf]
  %v620 = vld [vmem:[%s5 + $0x1c] sm:$0xf]
  %v621 = vld [vmem:[%s5 + $0x20] sm:$0xf]
  %v622 = vld [vmem:[%s5 + $0x24] sm:$0xf]
  %v623 = vld [vmem:[%s5 + $0x28] sm:$0xf]
  %v624 = vld [vmem:[%s5 + $0x2c] sm:$0xf]
  %v625 = vld [vmem:[%s5 + $0x30] sm:$0xf]
  %v626 = vld [vmem:[%s5 + $0x34] sm:$0xf]
  %v627 = vld [vmem:[%s5 + $0x38] sm:$0xf]
  %v628 = vld [vmem:[%s5 + $0x3c] sm:$0xf]
  %v629 = vunpack.c.l.bf16 %v613
  %v630 = vunpack.c.l.bf16 %v614
  %v631 = vunpack.c.l.bf16 %v615
  %v632 = vunpack.c.l.bf16 %v616
  %v633 = vunpack.c.l.bf16 %v617
  %v634 = vunpack.c.l.bf16 %v618
  %v635 = vunpack.c.l.bf16 %v619
  %v636 = vunpack.c.l.bf16 %v620
  %v637 = vunpack.c.l.bf16 %v621
  %v638 = vunpack.c.l.bf16 %v622
  %v639 = vunpack.c.l.bf16 %v623
  %v640 = vunpack.c.l.bf16 %v624
  %v641 = vunpack.c.l.bf16 %v625
  %v642 = vunpack.c.l.bf16 %v626
  %v643 = vunpack.c.l.bf16 %v627
  %v644 = vunpack.c.l.bf16 %v628
  %v645 = vadd.f32 %v574, %v629
  %v646 = vadd.f32 %v576, %v630
  %v647 = vadd.f32 %v579, %v631
  %v648 = vadd.f32 %v581, %v632
  %v649 = vadd.f32 %v584, %v633
  %v650 = vadd.f32 %v586, %v634
  %v651 = vadd.f32 %v589, %v635
  %v652 = vadd.f32 %v591, %v636
  %v653 = vadd.f32 %v594, %v637
  %v654 = vadd.f32 %v596, %v638
  %v655 = vadd.f32 %v599, %v639
  %v656 = vadd.f32 %v601, %v640
  %v657 = vadd.f32 %v604, %v641
  %v658 = vadd.f32 %v606, %v642
  %v659 = vadd.f32 %v609, %v643
  %v660 = vadd.f32 %v611, %v644
  %v661 = vmax.f32 %v645, 0.0
  %v662 = vmax.f32 %v646, 0.0
  %v663 = vmax.f32 %v647, 0.0
  %v664 = vmax.f32 %v648, 0.0
  %v665 = vmax.f32 %v649, 0.0
  %v666 = vmax.f32 %v650, 0.0
  %v667 = vmax.f32 %v651, 0.0
  %v668 = vmax.f32 %v652, 0.0
  %v669 = vmax.f32 %v653, 0.0
  %v670 = vmax.f32 %v654, 0.0
  %v671 = vmax.f32 %v655, 0.0
  %v672 = vmax.f32 %v656, 0.0
  %v673 = vmax.f32 %v657, 0.0
  %v674 = vmax.f32 %v658, 0.0
  %v675 = vmax.f32 %v659, 0.0
  %v676 = vmax.f32 %v660, 0.0
  %v677 = vpack.c.bf16 %v661, %v661
  %v678 = vpack.c.bf16 %v662, %v662
  %v679 = vpack.c.bf16 %v663, %v663
  %v680 = vpack.c.bf16 %v664, %v664
  %v681 = vpack.c.bf16 %v665, %v665
  %v682 = vpack.c.bf16 %v666, %v666
  %v683 = vpack.c.bf16 %v667, %v667
  %v684 = vpack.c.bf16 %v668, %v668
  %v685 = vpack.c.bf16 %v669, %v669
  %v686 = vpack.c.bf16 %v670, %v670
  %v687 = vpack.c.bf16 %v671, %v671
  %v688 = vpack.c.bf16 %v672, %v672
  %v689 = vpack.c.bf16 %v673, %v673
  %v690 = vpack.c.bf16 %v674, %v674
  %v691 = vpack.c.bf16 %v675, %v675
  %v692 = vpack.c.bf16 %v676, %v676
  %693 = vst [vmem:[%s6] sm:$0xf] %v677
  %694 = vst [vmem:[%s6 + $0x4] sm:$0xf] %v678
  %695 = vst [vmem:[%s6 + $0x8] sm:$0xf] %v679
  %696 = vst [vmem:[%s6 + $0xc] sm:$0xf] %v680
  %697 = vst [vmem:[%s6 + $0x10] sm:$0xf] %v681
  %698 = vst [vmem:[%s6 + $0x14] sm:$0xf] %v682
  %699 = vst [vmem:[%s6 + $0x18] sm:$0xf] %v683
  %700 = vst [vmem:[%s6 + $0x1c] sm:$0xf] %v684
  %701 = vst [vmem:[%s6 + $0x20] sm:$0xf] %v685
  %702 = vst [vmem:[%s6 + $0x24] sm:$0xf] %v686
  %703 = vst [vmem:[%s6 + $0x28] sm:$0xf] %v687
  %704 = vst [vmem:[%s6 + $0x2c] sm:$0xf] %v688
  %705 = vst [vmem:[%s6 + $0x30] sm:$0xf] %v689
  %706 = vst [vmem:[%s6 + $0x34] sm:$0xf] %v690
  %707 = vst [vmem:[%s6 + $0x38] sm:$0xf] %v691
  %708 = vst [vmem:[%s6 + $0x3c] sm:$0xf] %v692
  // Predicated region
  $region26: #{forward_two_blocks.7} parent=0 // pred_check
    _
  $region27: #{forward_two_blocks.7} parent=0 // pred_check_branch
    %710 = sbr.rel (0) target = $region29
  $region28: #{forward_two_blocks.7} parent=0 // pred_region
    _
  $region29: #{forward_two_blocks.7} parent=0 // pred_fallthru
    _
  // Predicated region
  $region30: #{forward_two_blocks.7} parent=0 // pred_check
    _
  $region31: #{forward_two_blocks.7} parent=0 // pred_check_branch
    %712 = sbr.rel (0) target = $region33
  $region32: #{forward_two_blocks.7} parent=0 // pred_region
    _
  $region33: #{forward_two_blocks.7} parent=0 // pred_fallthru
    _

</llo_original>
